<compile_context>
chip_gen: v7x
topology: tpu7x:2x2x1
jax: 0.10.0
libtpu: 0.0.40
codegen_flags: <defaults>
</compile_context>

<pallas_src>
import jax
import jax.numpy as jnp
from jax.experimental import pallas as pl
from jax.experimental.pallas import tpu as pltpu

K = 7     # kernel_size for every layer
PAD = 3   # padding for every layer ("same" output length)


# ----------------------------------------------------------------------------
# In-kernel conv layer: one im2col build + one MXU matmul (bias fused)
# ----------------------------------------------------------------------------
def _conv_layer(h, w, relu):
    """h: (Cin, L) f32.  w: (Cout, depth) f32, depth = K*Cin + 1 (+ zero pad),
    column K*Cin holds the bias.  Returns (Cout, L) f32."""
    cin, L = h.shape
    kc = K * cin
    depth = w.shape[1]
    z = jnp.zeros((cin, PAD), jnp.float32)
    hp = jnp.concatenate([z, h, z], axis=1)                        # (Cin, L+K-1)
    cols = [hp[:, k:k + L] for k in range(K)]                      # im2col taps
    cols.append(jnp.ones((1, L), jnp.float32))                     # bias row
    if depth > kc + 1:                                             # sublane-align depth
        cols.append(jnp.zeros((depth - kc - 1, L), jnp.float32))
    xcol = jnp.concatenate(cols, axis=0)                           # (depth, L)
    y = jnp.dot(w, xcol, preferred_element_type=jnp.float32)       # (Cout, L)
    return jnp.maximum(y, 0.0) if relu else y


def _autoencoder_kernel(x_ref, w1, w2, w3, w4, w5, o_ref):
    h = x_ref[0].astype(jnp.float32)             # (1, L) -- length on lanes
    h = _conv_layer(h, w1[...], True)            # (32, L)  Conv1d(1, 32) + ReLU
    h = _conv_layer(h, w2[...], True)            # (16, L)  Conv1d(32, 16) + ReLU
    h = _conv_layer(h, w3[...], True)            # (16, L)  ConvT(16, 16) + ReLU
    # TODO(synk): nn.Dropout(0.2) is identity in eval mode; train-mode RNG masking not implemented.
    h = _conv_layer(h, w4[...], True)            # (32, L)  ConvT(16, 32) + ReLU
    h = _conv_layer(h, w5[...], False)           # (8, L)   ConvT(32, 1); rows 1..7 are zero pad
    o_ref[0] = h[0:1, :].astype(o_ref.dtype)     # lane-dense (1, L) store in NCW


# ----------------------------------------------------------------------------
# pallas_call wrapper (single fused kernel, grid over batch)
# ----------------------------------------------------------------------------
def _fused_forward(x_ncw, mats):
    B, cin, L = x_ncw.shape
    assert cin == 1
    flops = 2 * B * L * K * (1 * 32 + 32 * 16 + 16 * 16 + 16 * 32 + 32 * 1)
    bytes_accessed = 4 * (x_ncw.size + B * L + sum(int(m.size) for m in mats))

    in_specs = [pl.BlockSpec((1, 1, L), lambda b: (b, 0, 0))]            # input, NCW
    in_specs += [pl.BlockSpec(m.shape, lambda b: (0, 0)) for m in mats]  # fused weight+bias slabs

    return pl.pallas_call(
        _autoencoder_kernel,
        out_shape=jax.ShapeDtypeStruct((B, 1, L), x_ncw.dtype),
        grid_spec=pltpu.PrefetchScalarGridSpec(
            num_scalar_prefetch=0,
            grid=(B,),
            in_specs=in_specs,
            out_specs=pl.BlockSpec((1, 1, L), lambda b: (b, 0, 0)),
        ),
        compiler_params=pltpu.CompilerParams(
            dimension_semantics=("parallel",),
        ),
        cost_estimate=pl.CostEstimate(
            flops=flops, transcendentals=0, bytes_accessed=bytes_accessed),
    )(x_ncw, *mats)


# ----------------------------------------------------------------------------
# Weight preparation: PyTorch layouts -> fused (Cout, K*Cin + 1 [+pad]) slabs
# ----------------------------------------------------------------------------
def _conv_w_mat(w_pt):
    # PyTorch Conv1d weight (Cout, Cin, K) -> (Cout, K*Cin), row-index = k*Cin + ci
    cout, cin, k = w_pt.shape
    return jnp.transpose(w_pt, (0, 2, 1)).reshape(cout, k * cin)


def _convT_w_mat(w_pt):
    # PyTorch ConvTranspose1d weight (Cin, Cout, K); stride=1, padding=PAD is the
    # "same" conv with taps flipped and channels swapped:
    #   W_eq[co, k*Cin + ci] = W[ci, co, K-1-k]
    cin, cout, k = w_pt.shape
    return jnp.transpose(jnp.flip(w_pt, axis=2), (1, 2, 0)).reshape(cout, k * cin)


def _augment(w_mat, b):
    """Append the bias as an extra contraction column, then zero-pad the depth
    to a multiple of 8 (sublane-aligned MXU contraction)."""
    m = jnp.concatenate([w_mat, b.reshape(-1, 1).astype(jnp.float32)], axis=1)
    pad_cols = (-m.shape[1]) % 8
    if pad_cols:
        m = jnp.pad(m, ((0, 0), (0, pad_cols)))
    return m


def _prepare_mats(p):
    w1 = _augment(_conv_w_mat(p["enc1_w"]), p["enc1_b"])     # (32, 8)
    w2 = _augment(_conv_w_mat(p["enc2_w"]), p["enc2_b"])     # (16, 232)
    w3 = _augment(_convT_w_mat(p["dec1_w"]), p["dec1_b"])    # (16, 120)
    w4 = _augment(_convT_w_mat(p["dec2_w"]), p["dec2_b"])    # (32, 120)
    w5 = _augment(_convT_w_mat(p["dec3_w"]), p["dec3_b"])    # (1, 232)
    w5 = jnp.pad(w5, ((0, 8 - w5.shape[0]), (0, 0)))         # pad Cout 1 -> 8
    return (w1, w2, w3, w4, w5)


@jax.jit
def autoencoder_forward(sample_ncw, params):
    """sample_ncw: (B, 1, L) -> (B, 1, L), matching Autoencoder.forward (eval mode)."""
    return _fused_forward(sample_ncw, _prepare_mats(params))


# ----------------------------------------------------------------------------
# Deterministic parameters in the original PyTorch layouts
# ----------------------------------------------------------------------------
def _uniform(key, shape, fan_in):
    bound = 1.0 / float(fan_in) ** 0.5
    return jax.random.uniform(key, shape, jnp.float32, -bound, bound)


def make_params(seed=0):
    ks = jax.random.split(jax.random.PRNGKey(seed), 10)
    p = {}
    # encoder: Conv1d(1, 32, 7), Conv1d(32, 16, 7)   -- weight (Cout, Cin, K)
    p["enc1_w"] = _uniform(ks[0], (32, 1, K), 1 * K)
    p["enc1_b"] = _uniform(ks[1], (32,), 1 * K)
    p["enc2_w"] = _uniform(ks[2], (16, 32, K), 32 * K)
    p["enc2_b"] = _uniform(ks[3], (16,), 32 * K)
    # decoder: ConvT(16,16,7), ConvT(16,32,7), ConvT(32,1,7)  -- weight (Cin, Cout, K)
    p["dec1_w"] = _uniform(ks[4], (16, 16, K), 16 * K)
    p["dec1_b"] = _uniform(ks[5], (16,), 16 * K)
    p["dec2_w"] = _uniform(ks[6], (16, 32, K), 16 * K)
    p["dec2_b"] = _uniform(ks[7], (32,), 16 * K)
    p["dec3_w"] = _uniform(ks[8], (32, 1, K), 32 * K)
    p["dec3_b"] = _uniform(ks[9], (1,), 32 * K)
    return p


# ----------------------------------------------------------------------------
# Independent plain-XLA reference working directly on PyTorch-layout weights
# (also validates the ConvTranspose1d -> conv weight transform)
# ----------------------------------------------------------------------------
def _ref_conv1d(x, w, b):
    y = jax.lax.conv_general_dilated(
        x, w, window_strides=(1,), padding=((PAD, PAD),),
        dimension_numbers=("NCW", "OIW", "NCW"))
    return y + b[None, :, None]


def _ref_convT1d(x, w, b):
    # Definitional PyTorch ConvTranspose1d (stride=1, padding=PAD):
    #   y[n, o, j] = b[o] + sum_{i,k} w[i, o, k] * x[n, i, j + PAD - k]
    B, cin, L = x.shape
    _, cout, k = w.shape
    xp = jnp.pad(x, ((0, 0), (0, 0), (k - 1 - PAD, PAD)))
    y = jnp.zeros((B, cout, L), jnp.float32)
    for kk in range(k):
        y = y + jnp.einsum("io,bil->bol", w[:, :, kk],
                           xp[:, :, k - 1 - kk:k - 1 - kk + L])
    return y + b[None, :, None]


def reference_forward(x, p):
    h = jax.nn.relu(_ref_conv1d(x, p["enc1_w"], p["enc1_b"]))
    h = jax.nn.relu(_ref_conv1d(h, p["enc2_w"], p["enc2_b"]))
    h = jax.nn.relu(_ref_convT1d(h, p["dec1_w"], p["dec1_b"]))
    h = jax.nn.relu(_ref_convT1d(h, p["dec2_w"], p["dec2_b"]))
    h = _ref_convT1d(h, p["dec3_w"], p["dec3_b"])
    return h


if __name__ == "__main__":
    params = make_params(seed=0)
    # PyTorch-style input: (batch, channels=1, length)
    x = jax.random.normal(jax.random.PRNGKey(0), (2, 1, 128), jnp.float32)

    out = jax.block_until_ready(autoencoder_forward(x, params))
    assert out.shape == (2, 1, 128), out.shape

    ref = jax.block_until_ready(reference_forward(x, params))
    max_err = float(jnp.max(jnp.abs(out - ref)))
    assert jnp.allclose(out, ref, rtol=1e-3, atol=1e-3), max_err

    print("KERNEL_OK")
</pallas_src>

<mosaic_0001>
module attributes {stable_mosaic.version = 11 : i64} {
  func.func @_autoencoder_kernel(%arg0: i32, %arg1: memref<1x1x128xf32, #tpu.memory_space<vmem>>, %arg2: memref<32x8xf32, #tpu.memory_space<vmem>>, %arg3: memref<16x232xf32, #tpu.memory_space<vmem>>, %arg4: memref<16x120xf32, #tpu.memory_space<vmem>>, %arg5: memref<32x120xf32, #tpu.memory_space<vmem>>, %arg6: memref<8x232xf32, #tpu.memory_space<vmem>>, %arg7: memref<1x1x128xf32, #tpu.memory_space<vmem>>) attributes {dimension_semantics = [#tpu.dimension_semantics<parallel>], iteration_bounds = array<i64: 2>, scalar_prefetch = 0 : i64, scratch_operands = 0 : i64, tpu.core_type = #tpu.core_type<tc>, window_params = [{transform_indices = @transform_0, window_bounds = array<i64: 1, 1, 128>}, {pipeline_mode = #tpu.pipeline_mode<synchronous>, transform_indices = @transform_1, window_bounds = array<i64: 32, 8>}, {pipeline_mode = #tpu.pipeline_mode<synchronous>, transform_indices = @transform_2, window_bounds = array<i64: 16, 232>}, {pipeline_mode = #tpu.pipeline_mode<synchronous>, transform_indices = @transform_3, window_bounds = array<i64: 16, 120>}, {pipeline_mode = #tpu.pipeline_mode<synchronous>, transform_indices = @transform_4, window_bounds = array<i64: 32, 120>}, {pipeline_mode = #tpu.pipeline_mode<synchronous>, transform_indices = @transform_5, window_bounds = array<i64: 8, 232>}, {transform_indices = @transform_6, window_bounds = array<i64: 1, 1, 128>}]} {
    %c0 = arith.constant 0 : index
    %c0_0 = arith.constant 0 : index
    %c0_1 = arith.constant 0 : index
    %0 = vector.load %arg1[%c0, %c0_0, %c0_1] : memref<1x1x128xf32, #tpu.memory_space<vmem>>, vector<1x1x128xf32>
    %1 = vector.shape_cast %0 : vector<1x1x128xf32> to vector<1x128xf32>
    %c0_2 = arith.constant 0 : index
    %c0_3 = arith.constant 0 : index
    %2 = vector.load %arg2[%c0_2, %c0_3] : memref<32x8xf32, #tpu.memory_space<vmem>>, vector<32x8xf32>
    %cst = arith.constant 0.000000e+00 : f32
    %3 = vector.broadcast %cst : f32 to vector<1x3xf32>
    %4 = tpu.concatenate %3, %1, %3 in 1 : vector<1x3xf32>, vector<1x128xf32>, vector<1x3xf32> -> vector<1x134xf32>
    %5 = vector.extract_strided_slice %4 {offsets = [0, 0], sizes = [1, 128], strides = [1, 1]} : vector<1x134xf32> to vector<1x128xf32>
    %6 = vector.extract_strided_slice %4 {offsets = [0, 1], sizes = [1, 128], strides = [1, 1]} : vector<1x134xf32> to vector<1x128xf32>
    %7 = vector.extract_strided_slice %4 {offsets = [0, 2], sizes = [1, 128], strides = [1, 1]} : vector<1x134xf32> to vector<1x128xf32>
    %8 = vector.extract_strided_slice %4 {offsets = [0, 3], sizes = [1, 128], strides = [1, 1]} : vector<1x134xf32> to vector<1x128xf32>
    %9 = vector.extract_strided_slice %4 {offsets = [0, 4], sizes = [1, 128], strides = [1, 1]} : vector<1x134xf32> to vector<1x128xf32>
    %10 = vector.extract_strided_slice %4 {offsets = [0, 5], sizes = [1, 128], strides = [1, 1]} : vector<1x134xf32> to vector<1x128xf32>
    %11 = vector.extract_strided_slice %4 {offsets = [0, 6], sizes = [1, 128], strides = [1, 1]} : vector<1x134xf32> to vector<1x128xf32>
    %cst_4 = arith.constant 1.000000e+00 : f32
    %12 = vector.broadcast %cst_4 : f32 to vector<1x128xf32>
    %13 = tpu.concatenate %5, %6, %7, %8, %9, %10, %11, %12 in 0 : vector<1x128xf32>, vector<1x128xf32>, vector<1x128xf32>, vector<1x128xf32>, vector<1x128xf32>, vector<1x128xf32>, vector<1x128xf32>, vector<1x128xf32> -> vector<8x128xf32>
    %cst_5 = arith.constant dense<0.000000e+00> : vector<32x128xf32>
    %14 = tpu.matmul %2, %13, %cst_5 {dimension_numbers = #tpu.dot_dimension_numbers<[1], [0], [0], [1], [0, 0, 1, 1], [], []>} : vector<32x8xf32>, vector<8x128xf32>, vector<32x128xf32> -> vector<32x128xf32>
    %cst_6 = arith.constant 0.000000e+00 : f32
    %15 = vector.broadcast %cst_6 : f32 to vector<32x128xf32>
    %16 = arith.maximumf %14, %15 : vector<32x128xf32>
    %c0_7 = arith.constant 0 : index
    %c0_8 = arith.constant 0 : index
    %17 = vector.load %arg3[%c0_7, %c0_8] : memref<16x232xf32, #tpu.memory_space<vmem>>, vector<16x232xf32>
    %cst_9 = arith.constant 0.000000e+00 : f32
    %18 = vector.broadcast %cst_9 : f32 to vector<32x3xf32>
    %19 = tpu.concatenate %18, %16, %18 in 1 : vector<32x3xf32>, vector<32x128xf32>, vector<32x3xf32> -> vector<32x134xf32>
    %20 = vector.extract_strided_slice %19 {offsets = [0, 0], sizes = [32, 128], strides = [1, 1]} : vector<32x134xf32> to vector<32x128xf32>
    %21 = vector.extract_strided_slice %19 {offsets = [0, 1], sizes = [32, 128], strides = [1, 1]} : vector<32x134xf32> to vector<32x128xf32>
    %22 = vector.extract_strided_slice %19 {offsets = [0, 2], sizes = [32, 128], strides = [1, 1]} : vector<32x134xf32> to vector<32x128xf32>
    %23 = vector.extract_strided_slice %19 {offsets = [0, 3], sizes = [32, 128], strides = [1, 1]} : vector<32x134xf32> to vector<32x128xf32>
    %24 = vector.extract_strided_slice %19 {offsets = [0, 4], sizes = [32, 128], strides = [1, 1]} : vector<32x134xf32> to vector<32x128xf32>
    %25 = vector.extract_strided_slice %19 {offsets = [0, 5], sizes = [32, 128], strides = [1, 1]} : vector<32x134xf32> to vector<32x128xf32>
    %26 = vector.extract_strided_slice %19 {offsets = [0, 6], sizes = [32, 128], strides = [1, 1]} : vector<32x134xf32> to vector<32x128xf32>
    %cst_10 = arith.constant 1.000000e+00 : f32
    %27 = vector.broadcast %cst_10 : f32 to vector<1x128xf32>
    %cst_11 = arith.constant 0.000000e+00 : f32
    %28 = vector.broadcast %cst_11 : f32 to vector<7x128xf32>
    %29 = tpu.concatenate %20, %21, %22, %23, %24, %25, %26, %27, %28 in 0 : vector<32x128xf32>, vector<32x128xf32>, vector<32x128xf32>, vector<32x128xf32>, vector<32x128xf32>, vector<32x128xf32>, vector<32x128xf32>, vector<1x128xf32>, vector<7x128xf32> -> vector<232x128xf32>
    %cst_12 = arith.constant dense<0.000000e+00> : vector<16x128xf32>
    %30 = tpu.matmul %17, %29, %cst_12 {dimension_numbers = #tpu.dot_dimension_numbers<[1], [0], [0], [1], [0, 0, 1, 1], [], []>} : vector<16x232xf32>, vector<232x128xf32>, vector<16x128xf32> -> vector<16x128xf32>
    %cst_13 = arith.constant 0.000000e+00 : f32
    %31 = vector.broadcast %cst_13 : f32 to vector<16x128xf32>
    %32 = arith.maximumf %30, %31 : vector<16x128xf32>
    %c0_14 = arith.constant 0 : index
    %c0_15 = arith.constant 0 : index
    %33 = vector.load %arg4[%c0_14, %c0_15] : memref<16x120xf32, #tpu.memory_space<vmem>>, vector<16x120xf32>
    %cst_16 = arith.constant 0.000000e+00 : f32
    %34 = vector.broadcast %cst_16 : f32 to vector<16x3xf32>
    %35 = tpu.concatenate %34, %32, %34 in 1 : vector<16x3xf32>, vector<16x128xf32>, vector<16x3xf32> -> vector<16x134xf32>
    %36 = vector.extract_strided_slice %35 {offsets = [0, 0], sizes = [16, 128], strides = [1, 1]} : vector<16x134xf32> to vector<16x128xf32>
    %37 = vector.extract_strided_slice %35 {offsets = [0, 1], sizes = [16, 128], strides = [1, 1]} : vector<16x134xf32> to vector<16x128xf32>
    %38 = vector.extract_strided_slice %35 {offsets = [0, 2], sizes = [16, 128], strides = [1, 1]} : vector<16x134xf32> to vector<16x128xf32>
    %39 = vector.extract_strided_slice %35 {offsets = [0, 3], sizes = [16, 128], strides = [1, 1]} : vector<16x134xf32> to vector<16x128xf32>
    %40 = vector.extract_strided_slice %35 {offsets = [0, 4], sizes = [16, 128], strides = [1, 1]} : vector<16x134xf32> to vector<16x128xf32>
    %41 = vector.extract_strided_slice %35 {offsets = [0, 5], sizes = [16, 128], strides = [1, 1]} : vector<16x134xf32> to vector<16x128xf32>
    %42 = vector.extract_strided_slice %35 {offsets = [0, 6], sizes = [16, 128], strides = [1, 1]} : vector<16x134xf32> to vector<16x128xf32>
    %cst_17 = arith.constant 1.000000e+00 : f32
    %43 = vector.broadcast %cst_17 : f32 to vector<1x128xf32>
    %cst_18 = arith.constant 0.000000e+00 : f32
    %44 = vector.broadcast %cst_18 : f32 to vector<7x128xf32>
    %45 = tpu.concatenate %36, %37, %38, %39, %40, %41, %42, %43, %44 in 0 : vector<16x128xf32>, vector<16x128xf32>, vector<16x128xf32>, vector<16x128xf32>, vector<16x128xf32>, vector<16x128xf32>, vector<16x128xf32>, vector<1x128xf32>, vector<7x128xf32> -> vector<120x128xf32>
    %cst_19 = arith.constant dense<0.000000e+00> : vector<16x128xf32>
    %46 = tpu.matmul %33, %45, %cst_19 {dimension_numbers = #tpu.dot_dimension_numbers<[1], [0], [0], [1], [0, 0, 1, 1], [], []>} : vector<16x120xf32>, vector<120x128xf32>, vector<16x128xf32> -> vector<16x128xf32>
    %cst_20 = arith.constant 0.000000e+00 : f32
    %47 = vector.broadcast %cst_20 : f32 to vector<16x128xf32>
    %48 = arith.maximumf %46, %47 : vector<16x128xf32>
    %c0_21 = arith.constant 0 : index
    %c0_22 = arith.constant 0 : index
    %49 = vector.load %arg5[%c0_21, %c0_22] : memref<32x120xf32, #tpu.memory_space<vmem>>, vector<32x120xf32>
    %cst_23 = arith.constant 0.000000e+00 : f32
    %50 = vector.broadcast %cst_23 : f32 to vector<16x3xf32>
    %51 = tpu.concatenate %50, %48, %50 in 1 : vector<16x3xf32>, vector<16x128xf32>, vector<16x3xf32> -> vector<16x134xf32>
    %52 = vector.extract_strided_slice %51 {offsets = [0, 0], sizes = [16, 128], strides = [1, 1]} : vector<16x134xf32> to vector<16x128xf32>
    %53 = vector.extract_strided_slice %51 {offsets = [0, 1], sizes = [16, 128], strides = [1, 1]} : vector<16x134xf32> to vector<16x128xf32>
    %54 = vector.extract_strided_slice %51 {offsets = [0, 2], sizes = [16, 128], strides = [1, 1]} : vector<16x134xf32> to vector<16x128xf32>
    %55 = vector.extract_strided_slice %51 {offsets = [0, 3], sizes = [16, 128], strides = [1, 1]} : vector<16x134xf32> to vector<16x128xf32>
    %56 = vector.extract_strided_slice %51 {offsets = [0, 4], sizes = [16, 128], strides = [1, 1]} : vector<16x134xf32> to vector<16x128xf32>
    %57 = vector.extract_strided_slice %51 {offsets = [0, 5], sizes = [16, 128], strides = [1, 1]} : vector<16x134xf32> to vector<16x128xf32>
    %58 = vector.extract_strided_slice %51 {offsets = [0, 6], sizes = [16, 128], strides = [1, 1]} : vector<16x134xf32> to vector<16x128xf32>
    %cst_24 = arith.constant 1.000000e+00 : f32
    %59 = vector.broadcast %cst_24 : f32 to vector<1x128xf32>
    %cst_25 = arith.constant 0.000000e+00 : f32
    %60 = vector.broadcast %cst_25 : f32 to vector<7x128xf32>
    %61 = tpu.concatenate %52, %53, %54, %55, %56, %57, %58, %59, %60 in 0 : vector<16x128xf32>, vector<16x128xf32>, vector<16x128xf32>, vector<16x128xf32>, vector<16x128xf32>, vector<16x128xf32>, vector<16x128xf32>, vector<1x128xf32>, vector<7x128xf32> -> vector<120x128xf32>
    %cst_26 = arith.constant dense<0.000000e+00> : vector<32x128xf32>
    %62 = tpu.matmul %49, %61, %cst_26 {dimension_numbers = #tpu.dot_dimension_numbers<[1], [0], [0], [1], [0, 0, 1, 1], [], []>} : vector<32x120xf32>, vector<120x128xf32>, vector<32x128xf32> -> vector<32x128xf32>
    %cst_27 = arith.constant 0.000000e+00 : f32
    %63 = vector.broadcast %cst_27 : f32 to vector<32x128xf32>
    %64 = arith.maximumf %62, %63 : vector<32x128xf32>
    %c0_28 = arith.constant 0 : index
    %c0_29 = arith.constant 0 : index
    %65 = vector.load %arg6[%c0_28, %c0_29] : memref<8x232xf32, #tpu.memory_space<vmem>>, vector<8x232xf32>
    %cst_30 = arith.constant 0.000000e+00 : f32
    %66 = vector.broadcast %cst_30 : f32 to vector<32x3xf32>
    %67 = tpu.concatenate %66, %64, %66 in 1 : vector<32x3xf32>, vector<32x128xf32>, vector<32x3xf32> -> vector<32x134xf32>
    %68 = vector.extract_strided_slice %67 {offsets = [0, 0], sizes = [32, 128], strides = [1, 1]} : vector<32x134xf32> to vector<32x128xf32>
    %69 = vector.extract_strided_slice %67 {offsets = [0, 1], sizes = [32, 128], strides = [1, 1]} : vector<32x134xf32> to vector<32x128xf32>
    %70 = vector.extract_strided_slice %67 {offsets = [0, 2], sizes = [32, 128], strides = [1, 1]} : vector<32x134xf32> to vector<32x128xf32>
    %71 = vector.extract_strided_slice %67 {offsets = [0, 3], sizes = [32, 128], strides = [1, 1]} : vector<32x134xf32> to vector<32x128xf32>
    %72 = vector.extract_strided_slice %67 {offsets = [0, 4], sizes = [32, 128], strides = [1, 1]} : vector<32x134xf32> to vector<32x128xf32>
    %73 = vector.extract_strided_slice %67 {offsets = [0, 5], sizes = [32, 128], strides = [1, 1]} : vector<32x134xf32> to vector<32x128xf32>
    %74 = vector.extract_strided_slice %67 {offsets = [0, 6], sizes = [32, 128], strides = [1, 1]} : vector<32x134xf32> to vector<32x128xf32>
    %cst_31 = arith.constant 1.000000e+00 : f32
    %75 = vector.broadcast %cst_31 : f32 to vector<1x128xf32>
    %cst_32 = arith.constant 0.000000e+00 : f32
    %76 = vector.broadcast %cst_32 : f32 to vector<7x128xf32>
    %77 = tpu.concatenate %68, %69, %70, %71, %72, %73, %74, %75, %76 in 0 : vector<32x128xf32>, vector<32x128xf32>, vector<32x128xf32>, vector<32x128xf32>, vector<32x128xf32>, vector<32x128xf32>, vector<32x128xf32>, vector<1x128xf32>, vector<7x128xf32> -> vector<232x128xf32>
    %cst_33 = arith.constant dense<0.000000e+00> : vector<8x128xf32>
    %78 = tpu.matmul %65, %77, %cst_33 {dimension_numbers = #tpu.dot_dimension_numbers<[1], [0], [0], [1], [0, 0, 1, 1], [], []>} : vector<8x232xf32>, vector<232x128xf32>, vector<8x128xf32> -> vector<8x128xf32>
    %79 = vector.extract_strided_slice %78 {offsets = [0, 0], sizes = [1, 128], strides = [1, 1]} : vector<8x128xf32> to vector<1x128xf32>
    %c0_34 = arith.constant 0 : index
    %c0_35 = arith.constant 0 : index
    %c0_36 = arith.constant 0 : index
    %80 = vector.load %arg7[%c0_34, %c0_35, %c0_36] : memref<1x1x128xf32, #tpu.memory_space<vmem>>, vector<1x1x128xf32>
    %81 = vector.shape_cast %80 : vector<1x1x128xf32> to vector<1x128xf32>
    %82 = vector.shape_cast %79 : vector<1x128xf32> to vector<1x1x128xf32>
    tpu.vector_store %arg7[%c0_34, %c0_35, %c0_36], %82 {strides = array<i32>} : memref<1x1x128xf32, #tpu.memory_space<vmem>>, vector<1x1x128xf32>,
    return
  }
  func.func @transform_0(%arg0: i32) -> (i32, i32, i32) {
    %c0_i32 = arith.constant 0 : i32
    %c0_i32_0 = arith.constant 0 : i32
    %c0_i32_1 = arith.constant 0 : i32
    return %arg0, %c0_i32, %c0_i32_0 : i32, i32, i32
  }
  func.func @transform_1(%arg0: i32) -> (i32, i32) {
    %c0_i32 = arith.constant 0 : i32
    %c0_i32_0 = arith.constant 0 : i32
    %c0_i32_1 = arith.constant 0 : i32
    return %c0_i32, %c0_i32_0 : i32, i32
  }
  func.func @transform_2(%arg0: i32) -> (i32, i32) {
    %c0_i32 = arith.constant 0 : i32
    %c0_i32_0 = arith.constant 0 : i32
    %c0_i32_1 = arith.constant 0 : i32
    return %c0_i32, %c0_i32_0 : i32, i32
  }
  func.func @transform_3(%arg0: i32) -> (i32, i32) {
    %c0_i32 = arith.constant 0 : i32
    %c0_i32_0 = arith.constant 0 : i32
    %c0_i32_1 = arith.constant 0 : i32
    return %c0_i32, %c0_i32_0 : i32, i32
  }
  func.func @transform_4(%arg0: i32) -> (i32, i32) {
    %c0_i32 = arith.constant 0 : i32
    %c0_i32_0 = arith.constant 0 : i32
    %c0_i32_1 = arith.constant 0 : i32
    return %c0_i32, %c0_i32_0 : i32, i32
  }
  func.func @transform_5(%arg0: i32) -> (i32, i32) {
    %c0_i32 = arith.constant 0 : i32
    %c0_i32_0 = arith.constant 0 : i32
    %c0_i32_1 = arith.constant 0 : i32
    return %c0_i32, %c0_i32_0 : i32, i32
  }
  func.func @transform_6(%arg0: i32) -> (i32, i32, i32) {
    %c0_i32 = arith.constant 0 : i32
    %c0_i32_0 = arith.constant 0 : i32
    %c0_i32_1 = arith.constant 0 : i32
    return %arg0, %c0_i32, %c0_i32_0 : i32, i32, i32
  }
}

</mosaic_0001>

<llo_original>
// kernel: autoencoder_forward.1
$region0: #{autoencoder_forward.1}
  #allocation0 [shape = 'u32[]', space=smem, size = 0x4, offset = 0x4, fixed_abs, tag = 'smem constant byte address 0x4 - core index']
  #allocation1 [shape = 'u32[144,128]{1,0:T(1,128)}', space=vmem, size = 0x12000, scoped, tag = 'internal scratch']
  %s0 = inlined_call_operand.vmem [shape: f32[2,1,128], index: 0, kind: input, shape index: {}]
  %s1 = inlined_call_operand.vmem [shape: f32[32,8], index: 1, kind: input, shape index: {}]
  %s2 = inlined_call_operand.vmem [shape: f32[16,232], index: 2, kind: input, shape index: {}]
  %s3 = inlined_call_operand.vmem [shape: f32[16,120], index: 3, kind: input, shape index: {}]
  %s4 = inlined_call_operand.vmem [shape: f32[32,120], index: 4, kind: input, shape index: {}]
  %s5 = inlined_call_operand.vmem [shape: f32[8,232], index: 5, kind: input, shape index: {}]
  %s6 = inlined_call_operand.hbm [shape: f32[2,1,128], index: 6, kind: output, shape index: {}]
  %s7 = sld [smem:[#allocation0]]
  $region57: #{autoencoder_forward.1} parent=0
    _
  %s9 = ssub.s32 1, %s7
  %s10 = scalar_select 0, %s9, %s7
  $region1: #{autoencoder_forward.1} parent=0
    #allocation2 [shape = 'u8[1024]{0}', space=vmem, size = 0x400, scoped, tag = 'output window, operand 0']
    #allocation3 [shape = 's32[2]{0}', space=sflag, size = 0x8, scoped, tag = 'scoped memory for autoencoder_forward.1']
    %11 = vsyncpa [#allocation3], 0
    %s12 = scalar_lea.sflag [#allocation3], 1
    %13 = vsyncpa %s12, 0
    loop: start=0, step=1, limit=4
    $region2: #{autoencoder_forward.1} parent=1 // loop_pre_header
      _
    $region3: #{autoencoder_forward.1} parent=1 // loop_header
      %s15 = sphi 0, %s19
      %p16 = scmp.ge.s32.totalorder %s15, 4
      %s25 = sphi 0, %s27
      %s28 = sphi 0, %s25
      %s29 = sphi 0, %s28
      %s45 = sphi 0, %s29
      %s49 = sphi 0, %s49
      %s51 = sphi 0, %s49
      %s52 = sphi 0, %s51
      %s66 = sphi 0, %s52
      %s70 = sphi 0, %s70
      %s72 = sphi 0, %s70
      %s73 = sphi 0, %s72
      %s87 = sphi 0, %s73
      %s91 = sphi 0, %s91
      %s93 = sphi 0, %s91
      %s94 = sphi 0, %s93
      %s108 = sphi 0, %s94
      %s112 = sphi 0, %s112
      %s114 = sphi 0, %s112
      %s115 = sphi 0, %s114
      %s129 = sphi 0, %s115
      %s133 = sphi 0, %s133
      %s135 = sphi 0, %s133
      %s136 = sphi 0, %s135
      %s150 = sphi 0, %s136
      %s156 = sphi 0, %s158
      %s159 = sphi 0, %s156
      %s160 = sphi 0, %s159
      %s176 = sphi 0, %s160
    $region4: #{autoencoder_forward.1} parent=1 // loop_header_branch
      %18 = sbr.rel (%p16) target = $region8
    $region5: #{autoencoder_forward.1} parent=1 // loop_body
      %s20 = ssub.s32 %s15, 1
      %s21 = ssub.s32 %s15, 2
      %s22 = sadd.s32 %s15, 1
      %s23 = ssub.s32 %s15, %s22
      %p24 = scmp.eq.s32.totalorder %s23, 0
      %s26 = sadd.s32 %s25, 1
      %s27 = scalar_select %p24, %s25, %s26
      %p30 = pneg %p24
      %p31 = scmp.eq.s32.totalorder %s15, 1
      %p32 = por %p30, %p31
      %p33 = scmp.ne.s32.totalorder %s25, %s28
      %p34 = scmp.eq.s32.totalorder %s15, 0
      %p35 = por %p33, %p34
      %p36 = scmp.ne.s32.totalorder %s25, %s28
      %p37 = scmp.eq.s32.totalorder %s20, 1
      %p38 = por %p36, %p37
      %p39 = scmp.ne.s32.totalorder %s28, %s29
      %p40 = scmp.eq.s32.totalorder %s20, 0
      %p41 = por %p39, %p40
      %p42 = scmp.ne.s32.totalorder %s28, %s29
      %p43 = scmp.eq.s32.totalorder %s21, 1
      %p44 = por %p42, %p43
      %p46 = scmp.ne.s32.totalorder %s29, %s45
      %p47 = scmp.eq.s32.totalorder %s21, 0
      %p48 = por %p46, %p47
      %s50 = sadd.s32 %s49, 1
      %p53 = scmp.eq.s32.totalorder %s15, 1
      %p54 = scmp.ne.s32.totalorder %s49, %s51
      %p55 = scmp.eq.s32.totalorder %s15, 0
      %p56 = por %p54, %p55
      %p57 = scmp.ne.s32.totalorder %s49, %s51
      %p58 = scmp.eq.s32.totalorder %s20, 1
      %p59 = por %p57, %p58
      %p60 = scmp.ne.s32.totalorder %s51, %s52
      %p61 = scmp.eq.s32.totalorder %s20, 0
      %p62 = por %p60, %p61
      %p63 = scmp.ne.s32.totalorder %s51, %s52
      %p64 = scmp.eq.s32.totalorder %s21, 1
      %p65 = por %p63, %p64
      %p67 = scmp.ne.s32.totalorder %s52, %s66
      %p68 = scmp.eq.s32.totalorder %s21, 0
      %p69 = por %p67, %p68
      %s71 = sadd.s32 %s70, 1
      %p74 = scmp.eq.s32.totalorder %s15, 1
      %p75 = scmp.ne.s32.totalorder %s70, %s72
      %p76 = scmp.eq.s32.totalorder %s15, 0
      %p77 = por %p75, %p76
      %p78 = scmp.ne.s32.totalorder %s70, %s72
      %p79 = scmp.eq.s32.totalorder %s20, 1
      %p80 = por %p78, %p79
      %p81 = scmp.ne.s32.totalorder %s72, %s73
      %p82 = scmp.eq.s32.totalorder %s20, 0
      %p83 = por %p81, %p82
      %p84 = scmp.ne.s32.totalorder %s72, %s73
      %p85 = scmp.eq.s32.totalorder %s21, 1
      %p86 = por %p84, %p85
      %p88 = scmp.ne.s32.totalorder %s73, %s87
      %p89 = scmp.eq.s32.totalorder %s21, 0
      %p90 = por %p88, %p89
      %s92 = sadd.s32 %s91, 1
      %p95 = scmp.eq.s32.totalorder %s15, 1
      %p96 = scmp.ne.s32.totalorder %s91, %s93
      %p97 = scmp.eq.s32.totalorder %s15, 0
      %p98 = por %p96, %p97
      %p99 = scmp.ne.s32.totalorder %s91, %s93
      %p100 = scmp.eq.s32.totalorder %s20, 1
      %p101 = por %p99, %p100
      %p102 = scmp.ne.s32.totalorder %s93, %s94
      %p103 = scmp.eq.s32.totalorder %s20, 0
      %p104 = por %p102, %p103
      %p105 = scmp.ne.s32.totalorder %s93, %s94
      %p106 = scmp.eq.s32.totalorder %s21, 1
      %p107 = por %p105, %p106
      %p109 = scmp.ne.s32.totalorder %s94, %s108
      %p110 = scmp.eq.s32.totalorder %s21, 0
      %p111 = por %p109, %p110
      %s113 = sadd.s32 %s112, 1
      %p116 = scmp.eq.s32.totalorder %s15, 1
      %p117 = scmp.ne.s32.totalorder %s112, %s114
      %p118 = scmp.eq.s32.totalorder %s15, 0
      %p119 = por %p117, %p118
      %p120 = scmp.ne.s32.totalorder %s112, %s114
      %p121 = scmp.eq.s32.totalorder %s20, 1
      %p122 = por %p120, %p121
      %p123 = scmp.ne.s32.totalorder %s114, %s115
      %p124 = scmp.eq.s32.totalorder %s20, 0
      %p125 = por %p123, %p124
      %p126 = scmp.ne.s32.totalorder %s114, %s115
      %p127 = scmp.eq.s32.totalorder %s21, 1
      %p128 = por %p126, %p127
      %p130 = scmp.ne.s32.totalorder %s115, %s129
      %p131 = scmp.eq.s32.totalorder %s21, 0
      %p132 = por %p130, %p131
      %s134 = sadd.s32 %s133, 1
      %p137 = scmp.eq.s32.totalorder %s15, 1
      %p138 = scmp.ne.s32.totalorder %s133, %s135
      %p139 = scmp.eq.s32.totalorder %s15, 0
      %p140 = por %p138, %p139
      %p141 = scmp.ne.s32.totalorder %s133, %s135
      %p142 = scmp.eq.s32.totalorder %s20, 1
      %p143 = por %p141, %p142
      %p144 = scmp.ne.s32.totalorder %s135, %s136
      %p145 = scmp.eq.s32.totalorder %s20, 0
      %p146 = por %p144, %p145
      %p147 = scmp.ne.s32.totalorder %s135, %s136
      %p148 = scmp.eq.s32.totalorder %s21, 1
      %p149 = por %p147, %p148
      %p151 = scmp.ne.s32.totalorder %s136, %s150
      %p152 = scmp.eq.s32.totalorder %s21, 0
      %p153 = por %p151, %p152
      %s154 = ssub.s32 %s15, %s22
      %p155 = scmp.eq.s32.totalorder %s154, 0
      %s157 = sadd.s32 %s156, 1
      %s158 = scalar_select %p155, %s156, %s157
      %p161 = pneg %p155
      %p162 = scmp.eq.s32.totalorder %s15, 1
      %p163 = por %p161, %p162
      %p164 = scmp.ne.s32.totalorder %s156, %s159
      %p165 = scmp.eq.s32.totalorder %s15, 0
      %p166 = por %p164, %p165
      %p167 = scmp.ne.s32.totalorder %s156, %s159
      %p168 = scmp.eq.s32.totalorder %s20, 1
      %p169 = por %p167, %p168
      %p170 = scmp.ne.s32.totalorder %s159, %s160
      %p171 = scmp.eq.s32.totalorder %s20, 0
      %p172 = por %p170, %p171
      %p173 = scmp.ne.s32.totalorder %s159, %s160
      %p174 = scmp.eq.s32.totalorder %s21, 1
      %p175 = por %p173, %p174
      %p177 = scmp.ne.s32.totalorder %s160, %s176
      %p178 = scmp.eq.s32.totalorder %s21, 0
      %p179 = por %p177, %p178
      %p180 = scmp.le.s32.totalorder 1, %s15
      %p181 = scmp.lt.s32.totalorder %s15, 3
      %p182 = pnand %p180, %p181
      %p183 = pneg %p182
      // Predicated region
      $region9: #{autoencoder_forward.1} parent=5 // pred_check
        _
      $region10: #{autoencoder_forward.1} parent=5 // pred_check_branch
        %185 = sbr.rel (%p182) target = $region12
      $region11: #{autoencoder_forward.1} parent=5 // pred_region
        %s186 = ssub.s32 %s15, 1
        // Predicated region
        $region13: #{autoencoder_forward.1} parent=11 // pred_check
          %p187 = pneg %p62
        $region14: #{autoencoder_forward.1} parent=11 // pred_check_branch
          %189 = sbr.rel (%p187) target = $region16
        $region15: #{autoencoder_forward.1} parent=11 // pred_region
          _
        $region16: #{autoencoder_forward.1} parent=11 // pred_fallthru
          _
        // Predicated region
        $region17: #{autoencoder_forward.1} parent=11 // pred_check
          %p190 = pneg %p83
        $region18: #{autoencoder_forward.1} parent=11 // pred_check_branch
          %192 = sbr.rel (%p190) target = $region20
        $region19: #{autoencoder_forward.1} parent=11 // pred_region
          _
        $region20: #{autoencoder_forward.1} parent=11 // pred_fallthru
          _
        // Predicated region
        $region21: #{autoencoder_forward.1} parent=11 // pred_check
          %p193 = pneg %p104
        $region22: #{autoencoder_forward.1} parent=11 // pred_check_branch
          %195 = sbr.rel (%p193) target = $region24
        $region23: #{autoencoder_forward.1} parent=11 // pred_region
          _
        $region24: #{autoencoder_forward.1} parent=11 // pred_fallthru
          _
        // Predicated region
        $region25: #{autoencoder_forward.1} parent=11 // pred_check
          %p196 = pneg %p125
        $region26: #{autoencoder_forward.1} parent=11 // pred_check_branch
          %198 = sbr.rel (%p196) target = $region28
        $region27: #{autoencoder_forward.1} parent=11 // pred_region
          _
        $region28: #{autoencoder_forward.1} parent=11 // pred_fallthru
          _
        // Predicated region
        $region29: #{autoencoder_forward.1} parent=11 // pred_check
          %p199 = pneg %p146
        $region30: #{autoencoder_forward.1} parent=11 // pred_check_branch
          %201 = sbr.rel (%p199) target = $region32
        $region31: #{autoencoder_forward.1} parent=11 // pred_region
          _
        $region32: #{autoencoder_forward.1} parent=11 // pred_fallthru
          _
      $region12: #{autoencoder_forward.1} parent=5 // pred_fallthru
        _
      %p202 = scmp.lt.s32.totalorder %s15, 2
      // Predicated region
      $region33: #{autoencoder_forward.1} parent=5 // pred_check
        %p203 = pneg %p202
      $region34: #{autoencoder_forward.1} parent=5 // pred_check_branch
        %205 = sbr.rel (%p203) target = $region36
      $region35: #{autoencoder_forward.1} parent=5 // pred_region
        // Predicated region
        $region37: #{autoencoder_forward.1} parent=35 // pred_check
          %p206 = pneg %p35
        $region38: #{autoencoder_forward.1} parent=35 // pred_check_branch
          %208 = sbr.rel (%p206) target = $region40
        $region39: #{autoencoder_forward.1} parent=35 // pred_region
          %p209 = scmp.lt.s32.totalorder %s15, 1
          %s210 = scalar_select %p209, %s15, 1
          %s211 = scalar_lea.vmem %s0, %s210
        $region40: #{autoencoder_forward.1} parent=35 // pred_fallthru
          _
      $region36: #{autoencoder_forward.1} parent=5 // pred_fallthru
        _
      %p212 = scmp.le.s32.totalorder 1, %s15
      %p213 = scmp.lt.s32.totalorder %s15, 3
      %p214 = pnand %p212, %p213
      %p215 = pneg %p214
      // Predicated region
      $region41: #{autoencoder_forward.1} parent=5 // pred_check
        _
      $region42: #{autoencoder_forward.1} parent=5 // pred_check_branch
        %217 = sbr.rel (%p214) target = $region44
      $region43: #{autoencoder_forward.1} parent=5 // pred_region
        %s218 = ssub.s32 %s15, 1
        %p219 = scmp.lt.s32.totalorder %s20, 1
        %s220 = scalar_select %p219, %s20, 1
        %s221 = scalar_lea.vmem %s0, %s220
        %p222 = pneg %p41
        %p223 = pneg %p38
        %p224 = pneg %p62
        %p225 = pneg %p59
        %p226 = pneg %p83
        %p227 = pneg %p80
        %p228 = pneg %p104
        %p229 = pneg %p101
        %p230 = pneg %p125
        %p231 = pneg %p122
        %p232 = pneg %p146
        %p233 = pneg %p143
        %p234 = pneg %p172
        %p235 = pneg %p169
        %s236 = sand.u32 %s159, 1
        %s237 = scalar_lea.sflag [#allocation3], %s236
        %s238 = sand.u32 %s159, 1
        %s239 = scalar_lea.vmem [#allocation2], %s238
        %p240 = scmp.lt.s32.totalorder %s20, 1
        %s241 = scalar_select %p240, %s20, 1
        %s242 = scalar_lea.vmem %s0, %s241
        %v243 = vld [vmem:[%s242] sm:$0x1]
        %v244 = vld [vmem:[%s1] sm:$0xff]
        %v245 = vld [vmem:[%s1 + $0x8] sm:$0xff]
        %v246 = vld [vmem:[%s1 + $0x10] sm:$0xff]
        %v247 = vld [vmem:[%s1 + $0x18] sm:$0xff]
        %v249 = vlaneseq
        %v250 = vshrl.u32 %v249, 7
        %v251 = vsub.s32 0, %v250
        %v252 = vrot.slane %v243, %v251
        %253 = vrot.lane.b32.xlu0 %v252, 3
        %v254 = vpop.permute.xlu0 %253
        %vm256 = vcmask 23552
        %v257 = vsel %vm256, 0.0, %v254
        %v258 = vsel %vm256, %v254, 0.0
        %v261 = vrot.slane %v257, 7
        %v262 = vrot.slane %v258, 7
        %263 = vrot.lane.b32.xlu0 %v261, 127
        %v264 = vpop.permute.xlu0 %263
        %265 = vrot.lane.b32.xlu0 %v262, 127
        %v266 = vpop.permute.xlu0 %265
        %vm267 = vcmask 1039360
        %v268 = vsel %vm267, %v264, %v266
        %v270 = vrot.slane %v257, 6
        %v271 = vrot.slane %v258, 6
        %272 = vrot.lane.b32.xlu0 %v270, 126
        %v273 = vpop.permute.xlu0 %272
        %274 = vrot.lane.b32.xlu0 %v271, 126
        %v275 = vpop.permute.xlu0 %274
        %vm276 = vcmask 1031168
        %v277 = vsel %vm276, %v273, %v275
        %v279 = vrot.slane %v257, 5
        %v280 = vrot.slane %v258, 5
        %281 = vrot.lane.b32.xlu0 %v279, 125
        %v282 = vpop.permute.xlu0 %281
        %283 = vrot.lane.b32.xlu0 %v280, 125
        %v284 = vpop.permute.xlu0 %283
        %vm285 = vcmask 1022976
        %v286 = vsel %vm285, %v282, %v284
        %v288 = vrot.slane %v257, 4
        %v289 = vrot.slane %v258, 4
        %290 = vrot.lane.b32.xlu0 %v288, 124
        %v291 = vpop.permute.xlu0 %290
        %292 = vrot.lane.b32.xlu0 %v289, 124
        %v293 = vpop.permute.xlu0 %292
        %vm294 = vcmask 1014784
        %v295 = vsel %vm294, %v291, %v293
        %v297 = vrot.slane %v257, 3
        %v298 = vrot.slane %v258, 3
        %299 = vrot.lane.b32.xlu0 %v297, 123
        %v300 = vpop.permute.xlu0 %299
        %301 = vrot.lane.b32.xlu0 %v298, 123
        %v302 = vpop.permute.xlu0 %301
        %vm303 = vcmask 1006592
        %v304 = vsel %vm303, %v300, %v302
        %v306 = vrot.slane %v257, 2
        %v307 = vrot.slane %v258, 2
        %308 = vrot.lane.b32.xlu0 %v306, 122
        %v309 = vpop.permute.xlu0 %308
        %310 = vrot.lane.b32.xlu0 %v307, 122
        %v311 = vpop.permute.xlu0 %310
        %vm312 = vcmask 998400
        %v313 = vsel %vm312, %v309, %v311
        %vm315 = vcmask 1040384
        %v316 = vsel %vm315, %v257, %v268
        %vm317 = vcmask 1041408
        %v318 = vsel %vm317, %v316, %v277
        %vm319 = vcmask 1042432
        %v320 = vsel %vm319, %v318, %v286
        %vm321 = vcmask 1043456
        %v322 = vsel %vm321, %v320, %v295
        %vm323 = vcmask 1044480
        %v324 = vsel %vm323, %v322, %v304
        %vm325 = vcmask 1045504
        %v326 = vsel %vm325, %v324, %v313
        %vm327 = vcmask 1046528
        %v328 = vsel %vm327, %v326, 1.0
        %vm329 = vcmask 64512
        %v331 = vsel %vm329, %v244, 0
        %v334 = vsel %vm329, %v245, 0
        %v337 = vsel %vm329, %v246, 0
        %v340 = vsel %vm329, %v247, 0
        %342 = vmatprep.subr.mxu0 0.0
        %343 = vmatpush1.msra.mxu0 %v328
        %344 = vmatprep.subr.mxu0 0.0
        %345 = vmatpush1.msra.mxu0 0.0
        %346 = vmatprep.subr.mxu0 0.0
        %347 = vmatpush1.msra.mxu0 0.0
        %348 = vmatprep.subr.mxu0 0.0
        %349 = vmatpush1.msra.mxu0 0.0
        %350 = vmatprep.subr.mxu0 0.0
        %351 = vmatpush1.msra.mxu0 0.0
        %352 = vmatprep.subr.mxu0 0.0
        %353 = vmatpush1.msra.mxu0 0.0
        %354 = vmatprep.subr.mxu0 0.0
        %355 = vmatpush1.msra.mxu0 0.0
        %356 = vmatprep.subr.mxu0 0.0
        %357 = vmatpush1.msra.mxu0 0.0
        %358 = vmatprep.subr.mxu0 0.0
        %359 = vmatpush1.msra.mxu0 0.0
        %360 = vmatprep.subr.mxu0 0.0
        %361 = vmatpush1.msra.mxu0 0.0
        %362 = vmatprep.subr.mxu0 0.0
        %363 = vmatpush1.msra.mxu0 0.0
        %364 = vmatprep.subr.mxu0 0.0
        %365 = vmatpush1.msra.mxu0 0.0
        %366 = vmatprep.subr.mxu0 0.0
        %367 = vmatpush1.msra.mxu0 0.0
        %368 = vmatprep.subr.mxu0 0.0
        %369 = vmatpush1.msra.mxu0 0.0
        %370 = vmatprep.subr.mxu0 0.0
        %371 = vmatpush1.msra.mxu0 0.0
        %372 = vmatprep.subr.mxu0 0.0
        %373 = vmatpush1.msra.mxu0 0.0
        %374 = vmatprep.subr.mxu0 0.0
        %375 = vmatpush1.msra.mxu0 0.0
        %376 = vmatprep.subr.mxu0 0.0
        %377 = vmatpush1.msra.mxu0 0.0
        %378 = vmatprep.subr.mxu0 0.0
        %379 = vmatpush1.msra.mxu0 0.0
        %380 = vmatprep.subr.mxu0 0.0
        %381 = vmatpush1.msra.mxu0 0.0
        %382 = vmatprep.subr.mxu0 0.0
        %383 = vmatpush1.msra.mxu0 0.0
        %384 = vmatprep.subr.mxu0 0.0
        %385 = vmatpush1.msra.mxu0 0.0
        %386 = vmatprep.subr.mxu0 0.0
        %387 = vmatpush1.msra.mxu0 0.0
        %388 = vmatprep.subr.mxu0 0.0
        %389 = vmatpush1.msra.mxu0 0.0
        %390 = vmatprep.subr.mxu0 0.0
        %391 = vmatpush1.msra.mxu0 0.0
        %392 = vmatprep.subr.mxu0 0.0
        %393 = vmatpush1.msra.mxu0 0.0
        %394 = vmatprep.subr.mxu0 0.0
        %395 = vmatpush1.msra.mxu0 0.0
        %396 = vmatprep.subr.mxu0 0.0
        %397 = vmatpush1.msra.mxu0 0.0
        %398 = vmatprep.subr.mxu0 0.0
        %399 = vmatpush1.msra.mxu0 0.0
        %400 = vmatprep.subr.mxu0 0.0
        %401 = vmatpush1.msra.mxu0 0.0
        %402 = vmatprep.subr.mxu0 0.0
        %403 = vmatpush1.msra.mxu0 0.0
        %404 = vmatprep.subr.mxu0 0.0
        %405 = vmatpush1.msra.mxu0 0.0
        %406 = vmatprep.mubr.f32.mxu0 0.0
        %407 = vmatmul.mubr.f32.gmra.mrb[0].mxu0 %v331
        %v408 = vpop.f32.mrb[0].mxu0
        %v409 = vadd.f32 0.0, %v408
        %v410 = vpop.f32.mrb[0].mxu0
        %411 = vmatprep.mubr.f32.mxu0 0.0
        %412 = vmatmul.mubr.f32.gmra.mrb[0].mxu0 %v334
        %v413 = vpop.f32.mrb[0].mxu0
        %v414 = vadd.f32 0.0, %v413
        %v415 = vpop.f32.mrb[0].mxu0
        %416 = vmatprep.mubr.f32.mxu0 0.0
        %417 = vmatmul.mubr.f32.gmra.mrb[0].mxu0 %v337
        %v418 = vpop.f32.mrb[0].mxu0
        %v419 = vadd.f32 0.0, %v418
        %v420 = vpop.f32.mrb[0].mxu0
        %421 = vmatprep.mubr.f32.mxu0 0.0
        %422 = vmatmul.mubr.f32.gmra.mrb[0].mxu0 %v340
        %v423 = vpop.f32.mrb[0].mxu0
        %v424 = vadd.f32 0.0, %v423
        %v425 = vpop.f32.mrb[0].mxu0
        %426 = vdwg.mxu0
        %v427 = vmax.f32 %v409, 0.0
        %v428 = vmax.f32 %v414, 0.0
        %v429 = vmax.f32 %v419, 0.0
        %v430 = vmax.f32 %v424, 0.0
        %v431 = vld [vmem:[%s2] sm:$0xff]
        %v432 = vld [vmem:[%s2 + $0x8] sm:$0xff]
        %v433 = vld [vmem:[%s2 + $0x10] sm:$0xff]
        %v434 = vld [vmem:[%s2 + $0x18] sm:$0xff]
        %439 = vrot.lane.b32.xlu0 %v427, 3
        %v440 = vpop.permute.xlu0 %439
        %441 = vrot.lane.b32.xlu0 %v428, 3
        %v442 = vpop.permute.xlu0 %441
        %443 = vrot.lane.b32.xlu0 %v429, 3
        %v444 = vpop.permute.xlu0 %443
        %445 = vrot.lane.b32.xlu0 %v430, 3
        %v446 = vpop.permute.xlu0 %445
        %v451 = vsel %vm256, 0.0, %v440
        %v452 = vsel %vm256, 0.0, %v442
        %v453 = vsel %vm256, 0.0, %v444
        %v454 = vsel %vm256, 0.0, %v446
        %v455 = vsel %vm256, %v440, 0.0
        %v456 = vsel %vm256, %v442, 0.0
        %v457 = vsel %vm256, %v444, 0.0
        %v458 = vsel %vm256, %v446, 0.0
        %467 = vrot.lane.b32.xlu0 %v451, 127
        %v468 = vpop.permute.xlu0 %467
        %469 = vrot.lane.b32.xlu0 %v455, 127
        %v470 = vpop.permute.xlu0 %469
        %471 = vrot.lane.b32.xlu0 %v452, 127
        %v472 = vpop.permute.xlu0 %471
        %473 = vrot.lane.b32.xlu0 %v456, 127
        %v474 = vpop.permute.xlu0 %473
        %475 = vrot.lane.b32.xlu0 %v453, 127
        %v476 = vpop.permute.xlu0 %475
        %477 = vrot.lane.b32.xlu0 %v457, 127
        %v478 = vpop.permute.xlu0 %477
        %479 = vrot.lane.b32.xlu0 %v454, 127
        %v480 = vpop.permute.xlu0 %479
        %481 = vrot.lane.b32.xlu0 %v458, 127
        %v482 = vpop.permute.xlu0 %481
        %v483 = vsel %vm267, %v468, %v470
        %v484 = vsel %vm267, %v472, %v474
        %v485 = vsel %vm267, %v476, %v478
        %v486 = vsel %vm267, %v480, %v482
        %491 = vrot.lane.b32.xlu0 %v451, 126
        %v492 = vpop.permute.xlu0 %491
        %493 = vrot.lane.b32.xlu0 %v455, 126
        %v494 = vpop.permute.xlu0 %493
        %495 = vrot.lane.b32.xlu0 %v452, 126
        %v496 = vpop.permute.xlu0 %495
        %497 = vrot.lane.b32.xlu0 %v456, 126
        %v498 = vpop.permute.xlu0 %497
        %499 = vrot.lane.b32.xlu0 %v453, 126
        %v500 = vpop.permute.xlu0 %499
        %501 = vrot.lane.b32.xlu0 %v457, 126
        %v502 = vpop.permute.xlu0 %501
        %503 = vrot.lane.b32.xlu0 %v454, 126
        %v504 = vpop.permute.xlu0 %503
        %505 = vrot.lane.b32.xlu0 %v458, 126
        %v506 = vpop.permute.xlu0 %505
        %v507 = vsel %vm276, %v492, %v494
        %v508 = vsel %vm276, %v496, %v498
        %v509 = vsel %vm276, %v500, %v502
        %v510 = vsel %vm276, %v504, %v506
        %515 = vrot.lane.b32.xlu0 %v451, 125
        %v516 = vpop.permute.xlu0 %515
        %517 = vrot.lane.b32.xlu0 %v455, 125
        %v518 = vpop.permute.xlu0 %517
        %519 = vrot.lane.b32.xlu0 %v452, 125
        %v520 = vpop.permute.xlu0 %519
        %521 = vrot.lane.b32.xlu0 %v456, 125
        %v522 = vpop.permute.xlu0 %521
        %523 = vrot.lane.b32.xlu0 %v453, 125
        %v524 = vpop.permute.xlu0 %523
        %525 = vrot.lane.b32.xlu0 %v457, 125
        %v526 = vpop.permute.xlu0 %525
        %527 = vrot.lane.b32.xlu0 %v454, 125
        %v528 = vpop.permute.xlu0 %527
        %529 = vrot.lane.b32.xlu0 %v458, 125
        %v530 = vpop.permute.xlu0 %529
        %v531 = vsel %vm285, %v516, %v518
        %v532 = vsel %vm285, %v520, %v522
        %v533 = vsel %vm285, %v524, %v526
        %v534 = vsel %vm285, %v528, %v530
        %539 = vrot.lane.b32.xlu0 %v451, 124
        %v540 = vpop.permute.xlu0 %539
        %541 = vrot.lane.b32.xlu0 %v455, 124
        %v542 = vpop.permute.xlu0 %541
        %543 = vrot.lane.b32.xlu0 %v452, 124
        %v544 = vpop.permute.xlu0 %543
        %545 = vrot.lane.b32.xlu0 %v456, 124
        %v546 = vpop.permute.xlu0 %545
        %547 = vrot.lane.b32.xlu0 %v453, 124
        %v548 = vpop.permute.xlu0 %547
        %549 = vrot.lane.b32.xlu0 %v457, 124
        %v550 = vpop.permute.xlu0 %549
        %551 = vrot.lane.b32.xlu0 %v454, 124
        %v552 = vpop.permute.xlu0 %551
        %553 = vrot.lane.b32.xlu0 %v458, 124
        %v554 = vpop.permute.xlu0 %553
        %v555 = vsel %vm294, %v540, %v542
        %v556 = vsel %vm294, %v544, %v546
        %v557 = vsel %vm294, %v548, %v550
        %v558 = vsel %vm294, %v552, %v554
        %563 = vrot.lane.b32.xlu0 %v451, 123
        %v564 = vpop.permute.xlu0 %563
        %565 = vrot.lane.b32.xlu0 %v455, 123
        %v566 = vpop.permute.xlu0 %565
        %567 = vrot.lane.b32.xlu0 %v452, 123
        %v568 = vpop.permute.xlu0 %567
        %569 = vrot.lane.b32.xlu0 %v456, 123
        %v570 = vpop.permute.xlu0 %569
        %571 = vrot.lane.b32.xlu0 %v453, 123
        %v572 = vpop.permute.xlu0 %571
        %573 = vrot.lane.b32.xlu0 %v457, 123
        %v574 = vpop.permute.xlu0 %573
        %575 = vrot.lane.b32.xlu0 %v454, 123
        %v576 = vpop.permute.xlu0 %575
        %577 = vrot.lane.b32.xlu0 %v458, 123
        %v578 = vpop.permute.xlu0 %577
        %v579 = vsel %vm303, %v564, %v566
        %v580 = vsel %vm303, %v568, %v570
        %v581 = vsel %vm303, %v572, %v574
        %v582 = vsel %vm303, %v576, %v578
        %587 = vrot.lane.b32.xlu0 %v451, 122
        %v588 = vpop.permute.xlu0 %587
        %589 = vrot.lane.b32.xlu0 %v455, 122
        %v590 = vpop.permute.xlu0 %589
        %591 = vrot.lane.b32.xlu0 %v452, 122
        %v592 = vpop.permute.xlu0 %591
        %593 = vrot.lane.b32.xlu0 %v456, 122
        %v594 = vpop.permute.xlu0 %593
        %595 = vrot.lane.b32.xlu0 %v453, 122
        %v596 = vpop.permute.xlu0 %595
        %597 = vrot.lane.b32.xlu0 %v457, 122
        %v598 = vpop.permute.xlu0 %597
        %599 = vrot.lane.b32.xlu0 %v454, 122
        %v600 = vpop.permute.xlu0 %599
        %601 = vrot.lane.b32.xlu0 %v458, 122
        %v602 = vpop.permute.xlu0 %601
        %v603 = vsel %vm312, %v588, %v590
        %v604 = vsel %vm312, %v592, %v594
        %v605 = vsel %vm312, %v596, %v598
        %v606 = vsel %vm312, %v600, %v602
        %v611 = vsel %vm315, 1.0, 0.0
        %vm612 = vcmask 850944
        %v614 = vsel %vm612, %v432, 0
        %v617 = vsel %vm612, %v434, 0
        %619 = vmatprep.subr.mxu0 0.0
        %620 = vmatpush1.msra.mxu0 %v451
        %621 = vmatprep.subr.mxu0 0.0
        %622 = vmatpush1.msra.mxu0 %v452
        %623 = vmatprep.subr.mxu0 0.0
        %624 = vmatpush1.msra.mxu0 %v453
        %625 = vmatprep.subr.mxu0 0.0
        %626 = vmatpush1.msra.mxu0 %v454
        %627 = vmatprep.subr.mxu0 0.0
        %628 = vmatpush1.msra.mxu0 %v483
        %629 = vmatprep.subr.mxu0 0.0
        %630 = vmatpush1.msra.mxu0 %v484
        %631 = vmatprep.subr.mxu0 0.0
        %632 = vmatpush1.msra.mxu0 %v485
        %633 = vmatprep.subr.mxu0 0.0
        %634 = vmatpush1.msra.mxu0 %v486
        %635 = vmatprep.subr.mxu0 0.0
        %636 = vmatpush1.msra.mxu0 %v507
        %637 = vmatprep.subr.mxu0 0.0
        %638 = vmatpush1.msra.mxu0 %v508
        %639 = vmatprep.subr.mxu0 0.0
        %640 = vmatpush1.msra.mxu0 %v509
        %641 = vmatprep.subr.mxu0 0.0
        %642 = vmatpush1.msra.mxu0 %v510
        %643 = vmatprep.subr.mxu0 0.0
        %644 = vmatpush1.msra.mxu0 %v531
        %645 = vmatprep.subr.mxu0 0.0
        %646 = vmatpush1.msra.mxu0 %v532
        %647 = vmatprep.subr.mxu0 0.0
        %648 = vmatpush1.msra.mxu0 %v533
        %649 = vmatprep.subr.mxu0 0.0
        %650 = vmatpush1.msra.mxu0 %v534
        %651 = vmatprep.subr.mxu0 0.0
        %652 = vmatpush1.msra.mxu0 %v555
        %653 = vmatprep.subr.mxu0 0.0
        %654 = vmatpush1.msra.mxu0 %v556
        %655 = vmatprep.subr.mxu0 0.0
        %656 = vmatpush1.msra.mxu0 %v557
        %657 = vmatprep.subr.mxu0 0.0
        %658 = vmatpush1.msra.mxu0 %v558
        %659 = vmatprep.subr.mxu0 0.0
        %660 = vmatpush1.msra.mxu0 %v579
        %661 = vmatprep.subr.mxu0 0.0
        %662 = vmatpush1.msra.mxu0 %v580
        %663 = vmatprep.subr.mxu0 0.0
        %664 = vmatpush1.msra.mxu0 %v581
        %665 = vmatprep.subr.mxu0 0.0
        %666 = vmatpush1.msra.mxu0 %v582
        %667 = vmatprep.subr.mxu0 0.0
        %668 = vmatpush1.msra.mxu0 %v603
        %669 = vmatprep.subr.mxu0 0.0
        %670 = vmatpush1.msra.mxu0 %v604
        %671 = vmatprep.subr.mxu0 0.0
        %672 = vmatpush1.msra.mxu0 %v605
        %673 = vmatprep.subr.mxu0 0.0
        %674 = vmatpush1.msra.mxu0 %v606
        %675 = vmatprep.subr.mxu0 0.0
        %676 = vmatpush1.msra.mxu0 %v611
        %677 = vmatprep.subr.mxu0 0.0
        %678 = vmatpush1.msra.mxu0 0.0
        %679 = vmatprep.subr.mxu0 0.0
        %680 = vmatpush1.msra.mxu0 0.0
        %681 = vmatprep.subr.mxu0 0.0
        %682 = vmatpush1.msra.mxu0 0.0
        %683 = vmatprep.mubr.f32.mxu0 %v614
        %684 = vmatmul.mubr.f32.gmra.mrb[0].mxu0 %v431
        %v685 = vpop.f32.mrb[0].mxu0
        %v686 = vadd.f32 0.0, %v685
        %v687 = vpop.f32.mrb[0].mxu0
        %688 = vmatprep.mubr.f32.mxu0 %v617
        %689 = vmatmul.mubr.f32.gmra.mrb[0].mxu0 %v433
        %v690 = vpop.f32.mrb[0].mxu0
        %v691 = vadd.f32 0.0, %v690
        %v692 = vpop.f32.mrb[0].mxu0
        %693 = vdwg.mxu0
        %v694 = vmax.f32 %v686, 0.0
        %v695 = vmax.f32 %v691, 0.0
        %v696 = vld [vmem:[%s3] sm:$0xff]
        %v697 = vld [vmem:[%s3 + $0x8] sm:$0xff]
        %700 = vrot.lane.b32.xlu0 %v694, 3
        %v701 = vpop.permute.xlu0 %700
        %702 = vrot.lane.b32.xlu0 %v695, 3
        %v703 = vpop.permute.xlu0 %702
        %v706 = vsel %vm256, 0.0, %v701
        %v707 = vsel %vm256, 0.0, %v703
        %v708 = vsel %vm256, %v701, 0.0
        %v709 = vsel %vm256, %v703, 0.0
        %714 = vrot.lane.b32.xlu0 %v706, 127
        %v715 = vpop.permute.xlu0 %714
        %716 = vrot.lane.b32.xlu0 %v708, 127
        %v717 = vpop.permute.xlu0 %716
        %718 = vrot.lane.b32.xlu0 %v707, 127
        %v719 = vpop.permute.xlu0 %718
        %720 = vrot.lane.b32.xlu0 %v709, 127
        %v721 = vpop.permute.xlu0 %720
        %v722 = vsel %vm267, %v715, %v717
        %v723 = vsel %vm267, %v719, %v721
        %726 = vrot.lane.b32.xlu0 %v706, 126
        %v727 = vpop.permute.xlu0 %726
        %728 = vrot.lane.b32.xlu0 %v708, 126
        %v729 = vpop.permute.xlu0 %728
        %730 = vrot.lane.b32.xlu0 %v707, 126
        %v731 = vpop.permute.xlu0 %730
        %732 = vrot.lane.b32.xlu0 %v709, 126
        %v733 = vpop.permute.xlu0 %732
        %v734 = vsel %vm276, %v727, %v729
        %v735 = vsel %vm276, %v731, %v733
        %738 = vrot.lane.b32.xlu0 %v706, 125
        %v739 = vpop.permute.xlu0 %738
        %740 = vrot.lane.b32.xlu0 %v708, 125
        %v741 = vpop.permute.xlu0 %740
        %742 = vrot.lane.b32.xlu0 %v707, 125
        %v743 = vpop.permute.xlu0 %742
        %744 = vrot.lane.b32.xlu0 %v709, 125
        %v745 = vpop.permute.xlu0 %744
        %v746 = vsel %vm285, %v739, %v741
        %v747 = vsel %vm285, %v743, %v745
        %750 = vrot.lane.b32.xlu0 %v706, 124
        %v751 = vpop.permute.xlu0 %750
        %752 = vrot.lane.b32.xlu0 %v708, 124
        %v753 = vpop.permute.xlu0 %752
        %754 = vrot.lane.b32.xlu0 %v707, 124
        %v755 = vpop.permute.xlu0 %754
        %756 = vrot.lane.b32.xlu0 %v709, 124
        %v757 = vpop.permute.xlu0 %756
        %v758 = vsel %vm294, %v751, %v753
        %v759 = vsel %vm294, %v755, %v757
        %762 = vrot.lane.b32.xlu0 %v706, 123
        %v763 = vpop.permute.xlu0 %762
        %764 = vrot.lane.b32.xlu0 %v708, 123
        %v765 = vpop.permute.xlu0 %764
        %766 = vrot.lane.b32.xlu0 %v707, 123
        %v767 = vpop.permute.xlu0 %766
        %768 = vrot.lane.b32.xlu0 %v709, 123
        %v769 = vpop.permute.xlu0 %768
        %v770 = vsel %vm303, %v763, %v765
        %v771 = vsel %vm303, %v767, %v769
        %774 = vrot.lane.b32.xlu0 %v706, 122
        %v775 = vpop.permute.xlu0 %774
        %776 = vrot.lane.b32.xlu0 %v708, 122
        %v777 = vpop.permute.xlu0 %776
        %778 = vrot.lane.b32.xlu0 %v707, 122
        %v779 = vpop.permute.xlu0 %778
        %780 = vrot.lane.b32.xlu0 %v709, 122
        %v781 = vpop.permute.xlu0 %780
        %v782 = vsel %vm312, %v775, %v777
        %v783 = vsel %vm312, %v779, %v781
        %vm786 = vcmask 982016
        %v788 = vsel %vm786, %v696, 0
        %v791 = vsel %vm786, %v697, 0
        %793 = vmatprep.subr.mxu0 0.0
        %794 = vmatpush1.msra.mxu0 %v706
        %795 = vmatprep.subr.mxu0 0.0
        %796 = vmatpush1.msra.mxu0 %v707
        %797 = vmatprep.subr.mxu0 0.0
        %798 = vmatpush1.msra.mxu0 %v722
        %799 = vmatprep.subr.mxu0 0.0
        %800 = vmatpush1.msra.mxu0 %v723
        %801 = vmatprep.subr.mxu0 0.0
        %802 = vmatpush1.msra.mxu0 %v734
        %803 = vmatprep.subr.mxu0 0.0
        %804 = vmatpush1.msra.mxu0 %v735
        %805 = vmatprep.subr.mxu0 0.0
        %806 = vmatpush1.msra.mxu0 %v746
        %807 = vmatprep.subr.mxu0 0.0
        %808 = vmatpush1.msra.mxu0 %v747
        %809 = vmatprep.subr.mxu0 0.0
        %810 = vmatpush1.msra.mxu0 %v758
        %811 = vmatprep.subr.mxu0 0.0
        %812 = vmatpush1.msra.mxu0 %v759
        %813 = vmatprep.subr.mxu0 0.0
        %814 = vmatpush1.msra.mxu0 %v770
        %815 = vmatprep.subr.mxu0 0.0
        %816 = vmatpush1.msra.mxu0 %v771
        %817 = vmatprep.subr.mxu0 0.0
        %818 = vmatpush1.msra.mxu0 %v782
        %819 = vmatprep.subr.mxu0 0.0
        %820 = vmatpush1.msra.mxu0 %v783
        %821 = vmatprep.subr.mxu0 0.0
        %822 = vmatpush1.msra.mxu0 %v611
        %823 = vmatprep.subr.mxu0 0.0
        %824 = vmatpush1.msra.mxu0 0.0
        %825 = vmatprep.subr.mxu0 0.0
        %826 = vmatpush1.msra.mxu0 0.0
        %827 = vmatprep.subr.mxu0 0.0
        %828 = vmatpush1.msra.mxu0 0.0
        %829 = vmatprep.subr.mxu0 0.0
        %830 = vmatpush1.msra.mxu0 0.0
        %831 = vmatprep.subr.mxu0 0.0
        %832 = vmatpush1.msra.mxu0 0.0
        %833 = vmatprep.subr.mxu0 0.0
        %834 = vmatpush1.msra.mxu0 0.0
        %835 = vmatprep.subr.mxu0 0.0
        %836 = vmatpush1.msra.mxu0 0.0
        %837 = vmatprep.subr.mxu0 0.0
        %838 = vmatpush1.msra.mxu0 0.0
        %839 = vmatprep.subr.mxu0 0.0
        %840 = vmatpush1.msra.mxu0 0.0
        %841 = vmatprep.subr.mxu0 0.0
        %842 = vmatpush1.msra.mxu0 0.0
        %843 = vmatprep.subr.mxu0 0.0
        %844 = vmatpush1.msra.mxu0 0.0
        %845 = vmatprep.subr.mxu0 0.0
        %846 = vmatpush1.msra.mxu0 0.0
        %847 = vmatprep.subr.mxu0 0.0
        %848 = vmatpush1.msra.mxu0 0.0
        %849 = vmatprep.subr.mxu0 0.0
        %850 = vmatpush1.msra.mxu0 0.0
        %851 = vmatprep.subr.mxu0 0.0
        %852 = vmatpush1.msra.mxu0 0.0
        %853 = vmatprep.subr.mxu0 0.0
        %854 = vmatpush1.msra.mxu0 0.0
        %855 = vmatprep.subr.mxu0 0.0
        %856 = vmatpush1.msra.mxu0 0.0
        %857 = vmatprep.mubr.f32.mxu0 0.0
        %858 = vmatmul.mubr.f32.gmra.mrb[0].mxu0 %v788
        %v859 = vpop.f32.mrb[0].mxu0
        %v860 = vadd.f32 0.0, %v859
        %v861 = vpop.f32.mrb[0].mxu0
        %862 = vmatprep.mubr.f32.mxu0 0.0
        %863 = vmatmul.mubr.f32.gmra.mrb[0].mxu0 %v791
        %v864 = vpop.f32.mrb[0].mxu0
        %v865 = vadd.f32 0.0, %v864
        %v866 = vpop.f32.mrb[0].mxu0
        %867 = vdwg.mxu0
        %v868 = vmax.f32 %v860, 0.0
        %v869 = vmax.f32 %v865, 0.0
        %v870 = vld [vmem:[%s4] sm:$0xff]
        %v871 = vld [vmem:[%s4 + $0x8] sm:$0xff]
        %v872 = vld [vmem:[%s4 + $0x10] sm:$0xff]
        %v873 = vld [vmem:[%s4 + $0x18] sm:$0xff]
        %876 = vrot.lane.b32.xlu0 %v868, 3
        %v877 = vpop.permute.xlu0 %876
        %878 = vrot.lane.b32.xlu0 %v869, 3
        %v879 = vpop.permute.xlu0 %878
        %v882 = vsel %vm256, 0.0, %v877
        %v883 = vsel %vm256, 0.0, %v879
        %v884 = vsel %vm256, %v877, 0.0
        %v885 = vsel %vm256, %v879, 0.0
        %890 = vrot.lane.b32.xlu0 %v882, 127
        %v891 = vpop.permute.xlu0 %890
        %892 = vrot.lane.b32.xlu0 %v884, 127
        %v893 = vpop.permute.xlu0 %892
        %894 = vrot.lane.b32.xlu0 %v883, 127
        %v895 = vpop.permute.xlu0 %894
        %896 = vrot.lane.b32.xlu0 %v885, 127
        %v897 = vpop.permute.xlu0 %896
        %v898 = vsel %vm267, %v891, %v893
        %v899 = vsel %vm267, %v895, %v897
        %902 = vrot.lane.b32.xlu0 %v882, 126
        %v903 = vpop.permute.xlu0 %902
        %904 = vrot.lane.b32.xlu0 %v884, 126
        %v905 = vpop.permute.xlu0 %904
        %906 = vrot.lane.b32.xlu0 %v883, 126
        %v907 = vpop.permute.xlu0 %906
        %908 = vrot.lane.b32.xlu0 %v885, 126
        %v909 = vpop.permute.xlu0 %908
        %v910 = vsel %vm276, %v903, %v905
        %v911 = vsel %vm276, %v907, %v909
        %914 = vrot.lane.b32.xlu0 %v882, 125
        %v915 = vpop.permute.xlu0 %914
        %916 = vrot.lane.b32.xlu0 %v884, 125
        %v917 = vpop.permute.xlu0 %916
        %918 = vrot.lane.b32.xlu0 %v883, 125
        %v919 = vpop.permute.xlu0 %918
        %920 = vrot.lane.b32.xlu0 %v885, 125
        %v921 = vpop.permute.xlu0 %920
        %v922 = vsel %vm285, %v915, %v917
        %v923 = vsel %vm285, %v919, %v921
        %926 = vrot.lane.b32.xlu0 %v882, 124
        %v927 = vpop.permute.xlu0 %926
        %928 = vrot.lane.b32.xlu0 %v884, 124
        %v929 = vpop.permute.xlu0 %928
        %930 = vrot.lane.b32.xlu0 %v883, 124
        %v931 = vpop.permute.xlu0 %930
        %932 = vrot.lane.b32.xlu0 %v885, 124
        %v933 = vpop.permute.xlu0 %932
        %v934 = vsel %vm294, %v927, %v929
        %v935 = vsel %vm294, %v931, %v933
        %938 = vrot.lane.b32.xlu0 %v882, 123
        %v939 = vpop.permute.xlu0 %938
        %940 = vrot.lane.b32.xlu0 %v884, 123
        %v941 = vpop.permute.xlu0 %940
        %942 = vrot.lane.b32.xlu0 %v883, 123
        %v943 = vpop.permute.xlu0 %942
        %944 = vrot.lane.b32.xlu0 %v885, 123
        %v945 = vpop.permute.xlu0 %944
        %v946 = vsel %vm303, %v939, %v941
        %v947 = vsel %vm303, %v943, %v945
        %950 = vrot.lane.b32.xlu0 %v882, 122
        %v951 = vpop.permute.xlu0 %950
        %952 = vrot.lane.b32.xlu0 %v884, 122
        %v953 = vpop.permute.xlu0 %952
        %954 = vrot.lane.b32.xlu0 %v883, 122
        %v955 = vpop.permute.xlu0 %954
        %956 = vrot.lane.b32.xlu0 %v885, 122
        %v957 = vpop.permute.xlu0 %956
        %v958 = vsel %vm312, %v951, %v953
        %v959 = vsel %vm312, %v955, %v957
        %v963 = vsel %vm786, %v870, 0
        %v966 = vsel %vm786, %v871, 0
        %v969 = vsel %vm786, %v872, 0
        %v972 = vsel %vm786, %v873, 0
        %974 = vmatprep.subr.mxu0 0.0
        %975 = vmatpush1.msra.mxu0 %v882
        %976 = vmatprep.subr.mxu0 0.0
        %977 = vmatpush1.msra.mxu0 %v883
        %978 = vmatprep.subr.mxu0 0.0
        %979 = vmatpush1.msra.mxu0 %v898
        %980 = vmatprep.subr.mxu0 0.0
        %981 = vmatpush1.msra.mxu0 %v899
        %982 = vmatprep.subr.mxu0 0.0
        %983 = vmatpush1.msra.mxu0 %v910
        %984 = vmatprep.subr.mxu0 0.0
        %985 = vmatpush1.msra.mxu0 %v911
        %986 = vmatprep.subr.mxu0 0.0
        %987 = vmatpush1.msra.mxu0 %v922
        %988 = vmatprep.subr.mxu0 0.0
        %989 = vmatpush1.msra.mxu0 %v923
        %990 = vmatprep.subr.mxu0 0.0
        %991 = vmatpush1.msra.mxu0 %v934
        %992 = vmatprep.subr.mxu0 0.0
        %993 = vmatpush1.msra.mxu0 %v935
        %994 = vmatprep.subr.mxu0 0.0
        %995 = vmatpush1.msra.mxu0 %v946
        %996 = vmatprep.subr.mxu0 0.0
        %997 = vmatpush1.msra.mxu0 %v947
        %998 = vmatprep.subr.mxu0 0.0
        %999 = vmatpush1.msra.mxu0 %v958
        %1000 = vmatprep.subr.mxu0 0.0
        %1001 = vmatpush1.msra.mxu0 %v959
        %1002 = vmatprep.subr.mxu0 0.0
        %1003 = vmatpush1.msra.mxu0 %v611
        %1004 = vmatprep.subr.mxu0 0.0
        %1005 = vmatpush1.msra.mxu0 0.0
        %1006 = vmatprep.subr.mxu0 0.0
        %1007 = vmatpush1.msra.mxu0 0.0
        %1008 = vmatprep.subr.mxu0 0.0
        %1009 = vmatpush1.msra.mxu0 0.0
        %1010 = vmatprep.subr.mxu0 0.0
        %1011 = vmatpush1.msra.mxu0 0.0
        %1012 = vmatprep.subr.mxu0 0.0
        %1013 = vmatpush1.msra.mxu0 0.0
        %1014 = vmatprep.subr.mxu0 0.0
        %1015 = vmatpush1.msra.mxu0 0.0
        %1016 = vmatprep.subr.mxu0 0.0
        %1017 = vmatpush1.msra.mxu0 0.0
        %1018 = vmatprep.subr.mxu0 0.0
        %1019 = vmatpush1.msra.mxu0 0.0
        %1020 = vmatprep.subr.mxu0 0.0
        %1021 = vmatpush1.msra.mxu0 0.0
        %1022 = vmatprep.subr.mxu0 0.0
        %1023 = vmatpush1.msra.mxu0 0.0
        %1024 = vmatprep.subr.mxu0 0.0
        %1025 = vmatpush1.msra.mxu0 0.0
        %1026 = vmatprep.subr.mxu0 0.0
        %1027 = vmatpush1.msra.mxu0 0.0
        %1028 = vmatprep.subr.mxu0 0.0
        %1029 = vmatpush1.msra.mxu0 0.0
        %1030 = vmatprep.subr.mxu0 0.0
        %1031 = vmatpush1.msra.mxu0 0.0
        %1032 = vmatprep.subr.mxu0 0.0
        %1033 = vmatpush1.msra.mxu0 0.0
        %1034 = vmatprep.subr.mxu0 0.0
        %1035 = vmatpush1.msra.mxu0 0.0
        %1036 = vmatprep.subr.mxu0 0.0
        %1037 = vmatpush1.msra.mxu0 0.0
        %1038 = vmatprep.mubr.f32.mxu0 0.0
        %1039 = vmatmul.mubr.f32.gmra.mrb[0].mxu0 %v963
        %v1040 = vpop.f32.mrb[0].mxu0
        %v1041 = vadd.f32 0.0, %v1040
        %v1042 = vpop.f32.mrb[0].mxu0
        %1043 = vmatprep.mubr.f32.mxu0 0.0
        %1044 = vmatmul.mubr.f32.gmra.mrb[0].mxu0 %v966
        %v1045 = vpop.f32.mrb[0].mxu0
        %v1046 = vadd.f32 0.0, %v1045
        %v1047 = vpop.f32.mrb[0].mxu0
        %1048 = vmatprep.mubr.f32.mxu0 0.0
        %1049 = vmatmul.mubr.f32.gmra.mrb[0].mxu0 %v969
        %v1050 = vpop.f32.mrb[0].mxu0
        %v1051 = vadd.f32 0.0, %v1050
        %v1052 = vpop.f32.mrb[0].mxu0
        %1053 = vmatprep.mubr.f32.mxu0 0.0
        %1054 = vmatmul.mubr.f32.gmra.mrb[0].mxu0 %v972
        %v1055 = vpop.f32.mrb[0].mxu0
        %v1056 = vadd.f32 0.0, %v1055
        %v1057 = vpop.f32.mrb[0].mxu0
        %1058 = vdwg.mxu0
        %v1059 = vmax.f32 %v1041, 0.0
        %v1060 = vmax.f32 %v1046, 0.0
        %v1061 = vmax.f32 %v1051, 0.0
        %v1062 = vmax.f32 %v1056, 0.0
        %v1063 = vld [vmem:[%s5] sm:$0xff]
        %v1064 = vld [vmem:[%s5 + $0x8] sm:$0xff]
        %1069 = vrot.lane.b32.xlu0 %v1059, 3
        %v1070 = vpop.permute.xlu0 %1069
        %1071 = vrot.lane.b32.xlu0 %v1060, 3
        %v1072 = vpop.permute.xlu0 %1071
        %1073 = vrot.lane.b32.xlu0 %v1061, 3
        %v1074 = vpop.permute.xlu0 %1073
        %1075 = vrot.lane.b32.xlu0 %v1062, 3
        %v1076 = vpop.permute.xlu0 %1075
        %v1081 = vsel %vm256, 0.0, %v1070
        %v1082 = vsel %vm256, 0.0, %v1072
        %v1083 = vsel %vm256, 0.0, %v1074
        %v1084 = vsel %vm256, 0.0, %v1076
        %v1085 = vsel %vm256, %v1070, 0.0
        %v1086 = vsel %vm256, %v1072, 0.0
        %v1087 = vsel %vm256, %v1074, 0.0
        %v1088 = vsel %vm256, %v1076, 0.0
        %1097 = vrot.lane.b32.xlu0 %v1081, 127
        %v1098 = vpop.permute.xlu0 %1097
        %1099 = vrot.lane.b32.xlu0 %v1085, 127
        %v1100 = vpop.permute.xlu0 %1099
        %1101 = vrot.lane.b32.xlu0 %v1082, 127
        %v1102 = vpop.permute.xlu0 %1101
        %1103 = vrot.lane.b32.xlu0 %v1086, 127
        %v1104 = vpop.permute.xlu0 %1103
        %1105 = vrot.lane.b32.xlu0 %v1083, 127
        %v1106 = vpop.permute.xlu0 %1105
        %1107 = vrot.lane.b32.xlu0 %v1087, 127
        %v1108 = vpop.permute.xlu0 %1107
        %1109 = vrot.lane.b32.xlu0 %v1084, 127
        %v1110 = vpop.permute.xlu0 %1109
        %1111 = vrot.lane.b32.xlu0 %v1088, 127
        %v1112 = vpop.permute.xlu0 %1111
        %v1113 = vsel %vm267, %v1098, %v1100
        %v1114 = vsel %vm267, %v1102, %v1104
        %v1115 = vsel %vm267, %v1106, %v1108
        %v1116 = vsel %vm267, %v1110, %v1112
        %1121 = vrot.lane.b32.xlu0 %v1081, 126
        %v1122 = vpop.permute.xlu0 %1121
        %1123 = vrot.lane.b32.xlu0 %v1085, 126
        %v1124 = vpop.permute.xlu0 %1123
        %1125 = vrot.lane.b32.xlu0 %v1082, 126
        %v1126 = vpop.permute.xlu0 %1125
        %1127 = vrot.lane.b32.xlu0 %v1086, 126
        %v1128 = vpop.permute.xlu0 %1127
        %1129 = vrot.lane.b32.xlu0 %v1083, 126
        %v1130 = vpop.permute.xlu0 %1129
        %1131 = vrot.lane.b32.xlu0 %v1087, 126
        %v1132 = vpop.permute.xlu0 %1131
        %1133 = vrot.lane.b32.xlu0 %v1084, 126
        %v1134 = vpop.permute.xlu0 %1133
        %1135 = vrot.lane.b32.xlu0 %v1088, 126
        %v1136 = vpop.permute.xlu0 %1135
        %v1137 = vsel %vm276, %v1122, %v1124
        %v1138 = vsel %vm276, %v1126, %v1128
        %v1139 = vsel %vm276, %v1130, %v1132
        %v1140 = vsel %vm276, %v1134, %v1136
        %1145 = vrot.lane.b32.xlu0 %v1081, 125
        %v1146 = vpop.permute.xlu0 %1145
        %1147 = vrot.lane.b32.xlu0 %v1085, 125
        %v1148 = vpop.permute.xlu0 %1147
        %1149 = vrot.lane.b32.xlu0 %v1082, 125
        %v1150 = vpop.permute.xlu0 %1149
        %1151 = vrot.lane.b32.xlu0 %v1086, 125
        %v1152 = vpop.permute.xlu0 %1151
        %1153 = vrot.lane.b32.xlu0 %v1083, 125
        %v1154 = vpop.permute.xlu0 %1153
        %1155 = vrot.lane.b32.xlu0 %v1087, 125
        %v1156 = vpop.permute.xlu0 %1155
        %1157 = vrot.lane.b32.xlu0 %v1084, 125
        %v1158 = vpop.permute.xlu0 %1157
        %1159 = vrot.lane.b32.xlu0 %v1088, 125
        %v1160 = vpop.permute.xlu0 %1159
        %v1161 = vsel %vm285, %v1146, %v1148
        %v1162 = vsel %vm285, %v1150, %v1152
        %v1163 = vsel %vm285, %v1154, %v1156
        %v1164 = vsel %vm285, %v1158, %v1160
        %1169 = vrot.lane.b32.xlu0 %v1081, 124
        %v1170 = vpop.permute.xlu0 %1169
        %1171 = vrot.lane.b32.xlu0 %v1085, 124
        %v1172 = vpop.permute.xlu0 %1171
        %1173 = vrot.lane.b32.xlu0 %v1082, 124
        %v1174 = vpop.permute.xlu0 %1173
        %1175 = vrot.lane.b32.xlu0 %v1086, 124
        %v1176 = vpop.permute.xlu0 %1175
        %1177 = vrot.lane.b32.xlu0 %v1083, 124
        %v1178 = vpop.permute.xlu0 %1177
        %1179 = vrot.lane.b32.xlu0 %v1087, 124
        %v1180 = vpop.permute.xlu0 %1179
        %1181 = vrot.lane.b32.xlu0 %v1084, 124
        %v1182 = vpop.permute.xlu0 %1181
        %1183 = vrot.lane.b32.xlu0 %v1088, 124
        %v1184 = vpop.permute.xlu0 %1183
        %v1185 = vsel %vm294, %v1170, %v1172
        %v1186 = vsel %vm294, %v1174, %v1176
        %v1187 = vsel %vm294, %v1178, %v1180
        %v1188 = vsel %vm294, %v1182, %v1184
        %1193 = vrot.lane.b32.xlu0 %v1081, 123
        %v1194 = vpop.permute.xlu0 %1193
        %1195 = vrot.lane.b32.xlu0 %v1085, 123
        %v1196 = vpop.permute.xlu0 %1195
        %1197 = vrot.lane.b32.xlu0 %v1082, 123
        %v1198 = vpop.permute.xlu0 %1197
        %1199 = vrot.lane.b32.xlu0 %v1086, 123
        %v1200 = vpop.permute.xlu0 %1199
        %1201 = vrot.lane.b32.xlu0 %v1083, 123
        %v1202 = vpop.permute.xlu0 %1201
        %1203 = vrot.lane.b32.xlu0 %v1087, 123
        %v1204 = vpop.permute.xlu0 %1203
        %1205 = vrot.lane.b32.xlu0 %v1084, 123
        %v1206 = vpop.permute.xlu0 %1205
        %1207 = vrot.lane.b32.xlu0 %v1088, 123
        %v1208 = vpop.permute.xlu0 %1207
        %v1209 = vsel %vm303, %v1194, %v1196
        %v1210 = vsel %vm303, %v1198, %v1200
        %v1211 = vsel %vm303, %v1202, %v1204
        %v1212 = vsel %vm303, %v1206, %v1208
        %1217 = vrot.lane.b32.xlu0 %v1081, 122
        %v1218 = vpop.permute.xlu0 %1217
        %1219 = vrot.lane.b32.xlu0 %v1085, 122
        %v1220 = vpop.permute.xlu0 %1219
        %1221 = vrot.lane.b32.xlu0 %v1082, 122
        %v1222 = vpop.permute.xlu0 %1221
        %1223 = vrot.lane.b32.xlu0 %v1086, 122
        %v1224 = vpop.permute.xlu0 %1223
        %1225 = vrot.lane.b32.xlu0 %v1083, 122
        %v1226 = vpop.permute.xlu0 %1225
        %1227 = vrot.lane.b32.xlu0 %v1087, 122
        %v1228 = vpop.permute.xlu0 %1227
        %1229 = vrot.lane.b32.xlu0 %v1084, 122
        %v1230 = vpop.permute.xlu0 %1229
        %1231 = vrot.lane.b32.xlu0 %v1088, 122
        %v1232 = vpop.permute.xlu0 %1231
        %v1233 = vsel %vm312, %v1218, %v1220
        %v1234 = vsel %vm312, %v1222, %v1224
        %v1235 = vsel %vm312, %v1226, %v1228
        %v1236 = vsel %vm312, %v1230, %v1232
        %v1242 = vsel %vm612, %v1064, 0
        %1244 = vmatprep.subr.mxu0 0.0
        %1245 = vmatpush1.msra.mxu0 %v1081
        %1246 = vmatprep.subr.mxu0 0.0
        %1247 = vmatpush1.msra.mxu0 %v1082
        %1248 = vmatprep.subr.mxu0 0.0
        %1249 = vmatpush1.msra.mxu0 %v1083
        %1250 = vmatprep.subr.mxu0 0.0
        %1251 = vmatpush1.msra.mxu0 %v1084
        %1252 = vmatprep.subr.mxu0 0.0
        %1253 = vmatpush1.msra.mxu0 %v1113
        %1254 = vmatprep.subr.mxu0 0.0
        %1255 = vmatpush1.msra.mxu0 %v1114
        %1256 = vmatprep.subr.mxu0 0.0
        %1257 = vmatpush1.msra.mxu0 %v1115
        %1258 = vmatprep.subr.mxu0 0.0
        %1259 = vmatpush1.msra.mxu0 %v1116
        %1260 = vmatprep.subr.mxu0 0.0
        %1261 = vmatpush1.msra.mxu0 %v1137
        %1262 = vmatprep.subr.mxu0 0.0
        %1263 = vmatpush1.msra.mxu0 %v1138
        %1264 = vmatprep.subr.mxu0 0.0
        %1265 = vmatpush1.msra.mxu0 %v1139
        %1266 = vmatprep.subr.mxu0 0.0
        %1267 = vmatpush1.msra.mxu0 %v1140
        %1268 = vmatprep.subr.mxu0 0.0
        %1269 = vmatpush1.msra.mxu0 %v1161
        %1270 = vmatprep.subr.mxu0 0.0
        %1271 = vmatpush1.msra.mxu0 %v1162
        %1272 = vmatprep.subr.mxu0 0.0
        %1273 = vmatpush1.msra.mxu0 %v1163
        %1274 = vmatprep.subr.mxu0 0.0
        %1275 = vmatpush1.msra.mxu0 %v1164
        %1276 = vmatprep.subr.mxu0 0.0
        %1277 = vmatpush1.msra.mxu0 %v1185
        %1278 = vmatprep.subr.mxu0 0.0
        %1279 = vmatpush1.msra.mxu0 %v1186
        %1280 = vmatprep.subr.mxu0 0.0
        %1281 = vmatpush1.msra.mxu0 %v1187
        %1282 = vmatprep.subr.mxu0 0.0
        %1283 = vmatpush1.msra.mxu0 %v1188
        %1284 = vmatprep.subr.mxu0 0.0
        %1285 = vmatpush1.msra.mxu0 %v1209
        %1286 = vmatprep.subr.mxu0 0.0
        %1287 = vmatpush1.msra.mxu0 %v1210
        %1288 = vmatprep.subr.mxu0 0.0
        %1289 = vmatpush1.msra.mxu0 %v1211
        %1290 = vmatprep.subr.mxu0 0.0
        %1291 = vmatpush1.msra.mxu0 %v1212
        %1292 = vmatprep.subr.mxu0 0.0
        %1293 = vmatpush1.msra.mxu0 %v1233
        %1294 = vmatprep.subr.mxu0 0.0
        %1295 = vmatpush1.msra.mxu0 %v1234
        %1296 = vmatprep.subr.mxu0 0.0
        %1297 = vmatpush1.msra.mxu0 %v1235
        %1298 = vmatprep.subr.mxu0 0.0
        %1299 = vmatpush1.msra.mxu0 %v1236
        %1300 = vmatprep.subr.mxu0 0.0
        %1301 = vmatpush1.msra.mxu0 %v611
        %1302 = vmatprep.subr.mxu0 0.0
        %1303 = vmatpush1.msra.mxu0 0.0
        %1304 = vmatprep.subr.mxu0 0.0
        %1305 = vmatpush1.msra.mxu0 0.0
        %1306 = vmatprep.subr.mxu0 0.0
        %1307 = vmatpush1.msra.mxu0 0.0
        %1308 = vmatprep.mubr.f32.mxu0 %v1242
        %1309 = vmatmul.mubr.f32.gmra.mrb[0].mxu0 %v1063
        %v1310 = vpop.f32.mrb[0].mxu0
        %v1311 = vadd.f32 0.0, %v1310
        %v1312 = vpop.f32.mrb[0].mxu0
        %1313 = vdwg.mxu0
        %1314 = vst [vmem:[%s239] sm:$0x1] %v1311
        %s1315 = sand.u32 %s159, 1
        %s1316 = scalar_lea.sflag [#allocation3], %s1315
        %s1317 = sand.u32 %s159, 1
        %s1318 = scalar_lea.vmem [#allocation2], %s1317
        // Predicated region
        $region45: #{autoencoder_forward.1} parent=43 // pred_check
          %p1319 = pneg %p169
        $region46: #{autoencoder_forward.1} parent=43 // pred_check_branch
          %1321 = sbr.rel (%p1319) target = $region48
        $region47: #{autoencoder_forward.1} parent=43 // pred_region
          %s1323 = ssub.s32 16, 16
          %1324 = vsyncadd %s1316, %s1323
          %s1325 = smul.addr %s20, 16
          %s1326 = scalar_lea.hbm %s6, %s1325
          %s1328 = sshll.u32 %s1318, 4
          %s1329 = int_to_ptr.vmem [resolvable:$true] %s1328
          %1331 = dma.vmem_to_hbm [thread:$0]  %s1329, 16, %s1326, %s1316
        $region48: #{autoencoder_forward.1} parent=43 // pred_fallthru
          _
      $region44: #{autoencoder_forward.1} parent=5 // pred_fallthru
        _
      %p1332 = scmp.le.s32.totalorder 2, %s15
      // Predicated region
      $region49: #{autoencoder_forward.1} parent=5 // pred_check
        %p1333 = pneg %p1332
      $region50: #{autoencoder_forward.1} parent=5 // pred_check_branch
        %1335 = sbr.rel (%p1333) target = $region52
      $region51: #{autoencoder_forward.1} parent=5 // pred_region
        %s1336 = ssub.s32 %s15, 2
        // Predicated region
        $region53: #{autoencoder_forward.1} parent=51 // pred_check
          %p1337 = pneg %p175
        $region54: #{autoencoder_forward.1} parent=51 // pred_check_branch
          %1339 = sbr.rel (%p1337) target = $region56
        $region55: #{autoencoder_forward.1} parent=51 // pred_region
          %s1340 = sand.u32 %s160, 1
          %s1341 = scalar_lea.sflag [#allocation3], %s1340
          %s1342 = sand.u32 %s160, 1
          %s1343 = scalar_lea.vmem [#allocation2], %s1342
          %1344 = dma.done %s1341, 16
        $region56: #{autoencoder_forward.1} parent=51 // pred_fallthru
          _
      $region52: #{autoencoder_forward.1} parent=5 // pred_fallthru
        _
    $region6: #{autoencoder_forward.1} parent=1 // loop_footer
      %s19 = sadd.s32 1, %s15
    $region7: #{autoencoder_forward.1} parent=1 // loop_footer_branch
      %14 = sbr.rel target = $region3
    $region8: #{autoencoder_forward.1} parent=1 // loop_exit
      _
    %1345 = vsyncpa [#allocation3], 1
    %s1346 = scalar_lea.sflag [#allocation3], 1
    %1347 = vsyncpa %s1346, 1

</llo_original>
